<compile_context>
chip_gen: v7x
topology: tpu7x:2x2x1
jax: 0.10.0
libtpu: 0.0.40
codegen_flags: <defaults>
</compile_context>

<pallas_src>
import jax
import jax.numpy as jnp
import numpy as np
from jax.experimental import pallas as pl
from jax.experimental.pallas import tpu as pltpu

# ----------------------------- small config ---------------------------------
B = 8               # batch
L = 16              # args.max_seq_length
D = 32              # args.bert_hidden_size (WORD_DIM)
FILTERS = [3, 4, 5]
FILTER_NUM = [100, 100, 100]
FP = 128            # per-filter channel count padded to a full lane tile
CH = len(FILTERS) * FP          # 384 padded concat width (3 lane tiles)
FMAX = max(FILTERS)             # 5  -> im2col window K = FMAX*D = 160
NP = 16             # positions padded to 16 (>= L - min(FILTERS) + 1 = 14); B*NP = 128 rows
FCW = 128           # fc path padded to a full lane tile (true width D = 32)
NCLASSES = 3        # 'dil' scenario -> single classification head
NTASKS = 2          # len(taskcla)
NEG = -1e30         # mask value for invalid conv positions (applied before max)

# misc-slab row indices
ROW_CB, ROW_GC, ROW_FC1B, ROW_GFC1, ROW_FC2B, ROW_GFC2, ROW_LASTB = range(7)
NMISC = 7

# TODO(synk): 'til' scenario (per-task ModuleList of Linear heads) not implemented; 'dil' single head used.
# TODO(synk): nn.Dropout(0.5) implemented as identity (inference / eval mode).
# TODO(synk): BertModel.from_pretrained is a frozen external encoder; its output is a synthetic input here.


# ------------------------------- kernel -------------------------------------
def net_kernel(lhs_ref, rhs_ref, pmask_ref, misc_ref,
               fc1w_ref, fc2w_ref, lastw_ref, out_ref):
    # All three Conv1d's as ONE im2col matmul:
    #   lhs (B*NP, FMAX*D)=(128,160) bf16  x  block-diagonal rhs (160, 384) bf16
    # f32 intermediate is (128, 384) = 192 KB; contraction depth K = 160.
    conv = jnp.dot(lhs_ref[...], rhs_ref[...],
                   preferred_element_type=jnp.float32)
    conv = conv.reshape(B, NP, CH)                 # tile-preserving leading split
    conv = conv + pmask_ref[...]                   # invalid positions -> -1e30
    pooled = jnp.max(conv, axis=1)                 # (B, CH) global max-pool

    # bias + ReLU hoisted over the masked position max; HAT conv gates (padded).
    hconv = jnp.maximum(pooled + misc_ref[ROW_CB], 0.0) * misc_ref[ROW_GC]

    # fc1 -> relu -> (dropout = identity) -> gate; fc path is 128-lane padded.
    h = jnp.dot(hconv.astype(jnp.bfloat16), fc1w_ref[...],
                preferred_element_type=jnp.float32) + misc_ref[ROW_FC1B][:, :FCW]
    h = jnp.maximum(h, 0.0) * misc_ref[ROW_GFC1][:, :FCW]
    # fc2 -> relu -> (dropout = identity) -> gate
    h = jnp.dot(h.astype(jnp.bfloat16), fc2w_ref[...],
                preferred_element_type=jnp.float32) + misc_ref[ROW_FC2B][:, :FCW]
    h = jnp.maximum(h, 0.0) * misc_ref[ROW_GFC2][:, :FCW]

    # classification head ('dil'); lastw already places the logits at lanes D..D+2.
    y = jnp.dot(h.astype(jnp.bfloat16), lastw_ref[...],
                preferred_element_type=jnp.float32) + misc_ref[ROW_LASTB][:, :FCW]

    # F.normalize(h, dim=1) (p=2, eps=1e-12) via EUP rsqrt.
    # Padded lanes of h are exactly zero, so the 128-lane sum == 32-lane sum.
    sumsq = jnp.sum(h * h, axis=1, keepdims=True)
    hnorm = h * jax.lax.rsqrt(jnp.maximum(sumsq, 1e-24))

    # Lane-dense output slab: lanes [0,D) = hnorm, [D,D+3) = y, rest zero.
    out_ref[...] = hnorm + y


# --------------------------- parameter packing --------------------------------
def pack_params(p):
    """One-time packing: block-diagonal im2col conv RHS, 128-lane-padded fc/last
    weights, the static position-validity mask, and the static bias rows of the
    misc slab.  Pure JAX glue (done once)."""
    bf16 = jnp.bfloat16

    # Block-diagonal conv RHS: (FMAX*D, CH). Column block i holds filter i's
    # weight (f_i*D rows) zero-padded to FMAX*D rows and FP channels.
    blocks = []
    for f, fn, wkey in zip(FILTERS, FILTER_NUM, ('c1_w', 'c2_w', 'c3_w')):
        blocks.append(jnp.pad(p[wkey], ((0, FMAX * D - f * D), (0, FP - fn))))
    conv_rhs = jnp.concatenate(blocks, axis=1).astype(bf16)           # (160, 384)

    # conv biases, padded per 128-lane filter block
    cb = jnp.concatenate(
        [jnp.pad(p['c1_b'], ((0, 0), (0, FP - FILTER_NUM[0]))),
         jnp.pad(p['c2_b'], ((0, 0), (0, FP - FILTER_NUM[1]))),
         jnp.pad(p['c3_b'], ((0, 0), (0, FP - FILTER_NUM[2])))], axis=1)  # (1, CH)

    # Position-validity mask (static): position pos is valid for filter block k
    # iff pos < L - FILTERS[k] + 1; invalid windows must be masked to -inf-ish
    # BEFORE the max (zero-padded tokens could otherwise win the max).
    pos = np.arange(NP)[:, None]
    blk = np.arange(CH)[None, :] // FP
    valid = (pos + blk) < (L - FILTERS[0] + 1)
    pos_mask = jnp.asarray(np.where(valid, 0.0, NEG), jnp.float32)    # (NP, CH)

    # fc1 rows regrouped per 128-padded filter block; columns zero-padded to FCW.
    fc1_rows, off = [], 0
    for fn in FILTER_NUM:
        fc1_rows.append(jnp.pad(p['fc1_w'][off:off + fn, :], ((0, FP - fn), (0, 0))))
        off += fn
    fc1w = jnp.pad(jnp.concatenate(fc1_rows, axis=0),
                   ((0, 0), (0, FCW - D))).astype(bf16)               # (CH, FCW)
    fc1b = jnp.pad(p['fc1_b'], ((0, 0), (0, FCW - D)))                # (1, FCW)

    fc2w = jnp.zeros((FCW, FCW), jnp.float32).at[:D, :D].set(p['fc2_w']).astype(bf16)
    fc2b = jnp.pad(p['fc2_b'], ((0, 0), (0, FCW - D)))

    # 'last' head: logits placed at lanes D..D+NCLASSES-1 so the output slab is
    # simply hnorm + y (no lane concat in the kernel).
    lastw = jnp.zeros((FCW, FCW), jnp.float32).at[:D, D:D + NCLASSES].set(
        p['last_w']).astype(bf16)
    lastb = jnp.zeros((1, FCW), jnp.float32).at[:, D:D + NCLASSES].set(p['last_b'])

    return dict(conv_rhs=conv_rhs, cb=cb, pos_mask=pos_mask,
                fc1w=fc1w, fc1b=fc1b, fc2w=fc2w, fc2b=fc2b,
                lastw=lastw, lastb=lastb)


def hat_masks(p, t, s):
    """HAT gates: sigmoid(s * Embedding(t)). Cheap, seq-independent -> wrapper."""
    gc1 = jax.nn.sigmoid(s * p['ec1'][t])     # (100,)
    gc2 = jax.nn.sigmoid(s * p['ec2'][t])     # (100,)
    gc3 = jax.nn.sigmoid(s * p['ec3'][t])     # (100,)
    gfc1 = jax.nn.sigmoid(s * p['efc1'][t])   # (D,)
    gfc2 = jax.nn.sigmoid(s * p['efc2'][t])   # (D,)
    return gc1, gc2, gc3, gfc1, gfc2


# ------------------------------- wrapper -------------------------------------
def net_forward(params, packed, t, sequence_output, s):
    """t: python int task id; sequence_output: (B, L, D); s: float gate temp."""
    Bv, Lv, Dv = sequence_output.shape

    # im2col window matrix (layout plumbing, wrapper side): row (b, p) holds
    # tokens[b, p:p+FMAX, :] flattened; windows reaching past L read zero-padded
    # tokens and their positions are masked to NEG inside the kernel.
    tok_pad = jnp.pad(sequence_output, ((0, 0), (0, NP + FMAX - 1 - Lv), (0, 0)))
    windows = jnp.stack([tok_pad[:, pp:pp + FMAX, :] for pp in range(NP)], axis=1)
    lhs = windows.reshape(Bv * NP, FMAX * Dv).astype(jnp.bfloat16)    # (128, 160)

    # HAT gates (zero-padded to full lane tiles; zeros keep padded lanes at 0).
    gc1, gc2, gc3, gfc1, gfc2 = hat_masks(params, t, s)
    padg = lambda g, w: jnp.pad(g, (0, w - g.shape[0]))[None, :]
    gc_all = jnp.concatenate([padg(gc1, FP), padg(gc2, FP), padg(gc3, FP)], axis=1)
    gfc1p, gfc2p = padg(gfc1, FCW), padg(gfc2, FCW)

    # One misc slab: all tiny bias/gate rows, pre-broadcast to B sublanes and
    # zero-padded to CH lanes -> a single (NMISC, B, CH) operand / DMA.
    def wide(x):
        x = jnp.pad(x, ((0, 0), (0, CH - x.shape[1])))
        return jnp.broadcast_to(x, (Bv, CH))
    misc = jnp.stack([wide(r) for r in
                      (packed['cb'], gc_all, packed['fc1b'], gfc1p,
                       packed['fc2b'], gfc2p, packed['lastb'])], axis=0)

    operands = (lhs, packed['conv_rhs'], packed['pos_mask'], misc,
                packed['fc1w'], packed['fc2w'], packed['lastw'])
    flops = (2 * (Bv * NP) * (FMAX * Dv) * CH      # conv matmul
             + 2 * Bv * CH * FCW                   # fc1
             + 4 * Bv * FCW * FCW)                 # fc2 + last
    bytes_accessed = (sum(int(np.prod(o.shape)) * o.dtype.itemsize for o in operands)
                      + Bv * FCW * 4)

    vmem = pl.BlockSpec(memory_space=pltpu.MemorySpace.VMEM)
    slab = pl.pallas_call(
        net_kernel,
        out_shape=jax.ShapeDtypeStruct((Bv, FCW), jnp.float32),
        in_specs=[vmem] * len(operands),
        out_specs=vmem,
        cost_estimate=pl.CostEstimate(flops=flops, transcendentals=Bv,
                                      bytes_accessed=bytes_accessed),
    )(*operands)

    hnorm = slab[:, :D]
    y = slab[:, D:D + NCLASSES]
    return {
        'y': y,
        'masks': [gc1[None, :], gc2[None, :], gc3[None, :],
                  gfc1[None, :], gfc2[None, :]],
        'normalized_pooled_rep': hnorm,
    }


# ------------------------ pure-JAX reference (f32) ----------------------------
def reference_forward(p, t, sequence_output, s):
    gc1, gc2, gc3, gfc1, gfc2 = hat_masks(p, t, s)
    seq = sequence_output.reshape(B, L * D)

    def conv_relu_maxpool(w, b, f):
        outs = []
        for pos in range(L - f + 1):
            win = seq[:, pos * D:(pos + f) * D]
            outs.append(win @ w + b)
        o = jnp.stack(outs, axis=0)               # (P, B, Fn)
        return jnp.max(jax.nn.relu(o), axis=0)    # (B, Fn)

    h1 = conv_relu_maxpool(p['c1_w'], p['c1_b'], FILTERS[0]) * gc1
    h2 = conv_relu_maxpool(p['c2_w'], p['c2_b'], FILTERS[1]) * gc2
    h3 = conv_relu_maxpool(p['c3_w'], p['c3_b'], FILTERS[2]) * gc3
    h = jnp.concatenate([h1, h2, h3], axis=1)
    h = jax.nn.relu(h @ p['fc1_w'] + p['fc1_b']) * gfc1
    h = jax.nn.relu(h @ p['fc2_w'] + p['fc2_b']) * gfc2
    y = h @ p['last_w'] + p['last_b']
    norm = jnp.sqrt(jnp.sum(h * h, axis=1, keepdims=True))
    hnorm = h / jnp.maximum(norm, 1e-12)
    return y, hnorm


# ---------------------------- deterministic init ------------------------------
def init_params(key):
    ks = jax.random.split(key, 16)
    scale = 0.05
    p = {}
    # Conv1d weights stored as (f*D, F) == torch weight (F, 1, f*D) transposed
    p['c1_w'] = scale * jax.random.normal(ks[0], (FILTERS[0] * D, FILTER_NUM[0]), jnp.float32)
    p['c1_b'] = scale * jax.random.normal(ks[1], (1, FILTER_NUM[0]), jnp.float32)
    p['c2_w'] = scale * jax.random.normal(ks[2], (FILTERS[1] * D, FILTER_NUM[1]), jnp.float32)
    p['c2_b'] = scale * jax.random.normal(ks[3], (1, FILTER_NUM[1]), jnp.float32)
    p['c3_w'] = scale * jax.random.normal(ks[4], (FILTERS[2] * D, FILTER_NUM[2]), jnp.float32)
    p['c3_b'] = scale * jax.random.normal(ks[5], (1, FILTER_NUM[2]), jnp.float32)
    # fc1: Linear(300, D); fc2: Linear(D, D); last: Linear(D, NCLASSES)
    p['fc1_w'] = scale * jax.random.normal(ks[6], (sum(FILTER_NUM), D), jnp.float32)
    p['fc1_b'] = scale * jax.random.normal(ks[7], (1, D), jnp.float32)
    p['fc2_w'] = scale * jax.random.normal(ks[8], (D, D), jnp.float32)
    p['fc2_b'] = scale * jax.random.normal(ks[9], (1, D), jnp.float32)
    p['last_w'] = scale * jax.random.normal(ks[10], (D, NCLASSES), jnp.float32)
    p['last_b'] = scale * jax.random.normal(ks[11], (1, NCLASSES), jnp.float32)
    # HAT task embeddings
    p['ec1'] = jax.random.normal(ks[12], (NTASKS, FILTER_NUM[0]), jnp.float32)
    p['ec2'] = jax.random.normal(ks[13], (NTASKS, FILTER_NUM[1]), jnp.float32)
    p['ec3'] = jax.random.normal(ks[14], (NTASKS, FILTER_NUM[2]), jnp.float32)
    efck = jax.random.split(ks[15], 2)
    p['efc1'] = jax.random.normal(efck[0], (NTASKS, D), jnp.float32)
    p['efc2'] = jax.random.normal(efck[1], (NTASKS, D), jnp.float32)
    return p


if __name__ == "__main__":
    key = jax.random.PRNGKey(0)
    pk, xk = jax.random.split(key)
    params = init_params(pk)
    packed = pack_params(params)

    # Synthetic frozen-BERT sequence output: (B, L, D)
    sequence_output = jax.random.normal(xk, (B, L, D), jnp.float32)

    out = net_forward(params, packed, t=0, sequence_output=sequence_output, s=4.0)
    jax.block_until_ready(out['y'])
    jax.block_until_ready(out['normalized_pooled_rep'])
    for m in out['masks']:
        jax.block_until_ready(m)

    assert out['y'].shape == (B, NCLASSES)
    assert out['normalized_pooled_rep'].shape == (B, D)

    # Sanity-check against f32 pure-JAX reference (loose tolerance: bf16 dots).
    y_ref, h_ref = reference_forward(params, 0, sequence_output, 4.0)
    assert np.allclose(np.asarray(out['y']), np.asarray(y_ref),
                       atol=5e-2, rtol=5e-2)
    assert np.allclose(np.asarray(out['normalized_pooled_rep']), np.asarray(h_ref),
                       atol=5e-2, rtol=5e-2)
    print("KERNEL_OK")
</pallas_src>

<mosaic_0001>
module attributes {stable_mosaic.version = 11 : i64} {
  func.func @net_kernel(%arg0: memref<128x160xbf16, #tpu.memory_space<vmem>>, %arg1: memref<160x384xbf16, #tpu.memory_space<vmem>>, %arg2: memref<16x384xf32, #tpu.memory_space<vmem>>, %arg3: memref<7x8x384xf32, #tpu.memory_space<vmem>>, %arg4: memref<384x128xbf16, #tpu.memory_space<vmem>>, %arg5: memref<128x128xbf16, #tpu.memory_space<vmem>>, %arg6: memref<128x128xbf16, #tpu.memory_space<vmem>>, %arg7: memref<8x128xf32, #tpu.memory_space<vmem>>) attributes {dimension_semantics = [], scalar_prefetch = 0 : i64, scratch_operands = 0 : i64, tpu.core_type = #tpu.core_type<tc>} {
    %c0 = arith.constant 0 : index
    %c0_0 = arith.constant 0 : index
    %0 = vector.load %arg0[%c0, %c0_0] : memref<128x160xbf16, #tpu.memory_space<vmem>>, vector<128x160xbf16>
    %c0_1 = arith.constant 0 : index
    %c0_2 = arith.constant 0 : index
    %1 = vector.load %arg1[%c0_1, %c0_2] : memref<160x384xbf16, #tpu.memory_space<vmem>>, vector<160x384xbf16>
    %cst = arith.constant dense<0.000000e+00> : vector<128x384xf32>
    %2 = tpu.matmul %0, %1, %cst {dimension_numbers = #tpu.dot_dimension_numbers<[1], [0], [0], [1], [0, 0, 1, 1], [], []>} : vector<128x160xbf16>, vector<160x384xbf16>, vector<128x384xf32> -> vector<128x384xf32>
    %3 = vector.shape_cast %2 : vector<128x384xf32> to vector<8x16x384xf32>
    %c0_3 = arith.constant 0 : index
    %c0_4 = arith.constant 0 : index
    %4 = vector.load %arg2[%c0_3, %c0_4] : memref<16x384xf32, #tpu.memory_space<vmem>>, vector<16x384xf32>
    %5 = vector.shape_cast %4 : vector<16x384xf32> to vector<1x16x384xf32>
    %6 = vector.broadcast %5 : vector<1x16x384xf32> to vector<8x16x384xf32>
    %7 = arith.addf %3, %6 : vector<8x16x384xf32>
    %cst_5 = arith.constant dense<0xFF800000> : vector<8x384xf32>
    %8 = vector.multi_reduction <maximumf>, %7, %cst_5 [1] : vector<8x16x384xf32> to vector<8x384xf32>
    %c0_6 = arith.constant 0 : index
    %c0_7 = arith.constant 0 : index
    %c0_8 = arith.constant 0 : index
    %9 = vector.load %arg3[%c0_6, %c0_7, %c0_8] : memref<7x8x384xf32, #tpu.memory_space<vmem>>, vector<1x8x384xf32>
    %10 = vector.shape_cast %9 : vector<1x8x384xf32> to vector<8x384xf32>
    %11 = arith.addf %8, %10 : vector<8x384xf32>
    %cst_9 = arith.constant 0.000000e+00 : f32
    %12 = vector.broadcast %cst_9 : f32 to vector<8x384xf32>
    %13 = arith.maximumf %11, %12 : vector<8x384xf32>
    %c1 = arith.constant 1 : index
    %c0_10 = arith.constant 0 : index
    %c0_11 = arith.constant 0 : index
    %14 = vector.load %arg3[%c1, %c0_10, %c0_11] : memref<7x8x384xf32, #tpu.memory_space<vmem>>, vector<1x8x384xf32>
    %15 = vector.shape_cast %14 : vector<1x8x384xf32> to vector<8x384xf32>
    %16 = arith.mulf %13, %15 : vector<8x384xf32>
    %17 = arith.truncf %16 : vector<8x384xf32> to vector<8x384xbf16>
    %c0_12 = arith.constant 0 : index
    %c0_13 = arith.constant 0 : index
    %18 = vector.load %arg4[%c0_12, %c0_13] : memref<384x128xbf16, #tpu.memory_space<vmem>>, vector<384x128xbf16>
    %cst_14 = arith.constant dense<0.000000e+00> : vector<8x128xf32>
    %19 = tpu.matmul %17, %18, %cst_14 {dimension_numbers = #tpu.dot_dimension_numbers<[1], [0], [0], [1], [0, 0, 1, 1], [], []>} : vector<8x384xbf16>, vector<384x128xbf16>, vector<8x128xf32> -> vector<8x128xf32>
    %c2 = arith.constant 2 : index
    %c0_15 = arith.constant 0 : index
    %c0_16 = arith.constant 0 : index
    %20 = vector.load %arg3[%c2, %c0_15, %c0_16] : memref<7x8x384xf32, #tpu.memory_space<vmem>>, vector<1x8x384xf32>
    %21 = vector.shape_cast %20 : vector<1x8x384xf32> to vector<8x384xf32>
    %22 = vector.extract_strided_slice %21 {offsets = [0, 0], sizes = [8, 128], strides = [1, 1]} : vector<8x384xf32> to vector<8x128xf32>
    %23 = arith.addf %19, %22 : vector<8x128xf32>
    %cst_17 = arith.constant 0.000000e+00 : f32
    %24 = vector.broadcast %cst_17 : f32 to vector<8x128xf32>
    %25 = arith.maximumf %23, %24 : vector<8x128xf32>
    %c3 = arith.constant 3 : index
    %c0_18 = arith.constant 0 : index
    %c0_19 = arith.constant 0 : index
    %26 = vector.load %arg3[%c3, %c0_18, %c0_19] : memref<7x8x384xf32, #tpu.memory_space<vmem>>, vector<1x8x384xf32>
    %27 = vector.shape_cast %26 : vector<1x8x384xf32> to vector<8x384xf32>
    %28 = vector.extract_strided_slice %27 {offsets = [0, 0], sizes = [8, 128], strides = [1, 1]} : vector<8x384xf32> to vector<8x128xf32>
    %29 = arith.mulf %25, %28 : vector<8x128xf32>
    %30 = arith.truncf %29 : vector<8x128xf32> to vector<8x128xbf16>
    %c0_20 = arith.constant 0 : index
    %c0_21 = arith.constant 0 : index
    %31 = vector.load %arg5[%c0_20, %c0_21] : memref<128x128xbf16, #tpu.memory_space<vmem>>, vector<128x128xbf16>
    %cst_22 = arith.constant dense<0.000000e+00> : vector<8x128xf32>
    %32 = tpu.matmul %30, %31, %cst_22 {dimension_numbers = #tpu.dot_dimension_numbers<[1], [0], [0], [1], [0, 0, 1, 1], [], []>} : vector<8x128xbf16>, vector<128x128xbf16>, vector<8x128xf32> -> vector<8x128xf32>
    %c4 = arith.constant 4 : index
    %c0_23 = arith.constant 0 : index
    %c0_24 = arith.constant 0 : index
    %33 = vector.load %arg3[%c4, %c0_23, %c0_24] : memref<7x8x384xf32, #tpu.memory_space<vmem>>, vector<1x8x384xf32>
    %34 = vector.shape_cast %33 : vector<1x8x384xf32> to vector<8x384xf32>
    %35 = vector.extract_strided_slice %34 {offsets = [0, 0], sizes = [8, 128], strides = [1, 1]} : vector<8x384xf32> to vector<8x128xf32>
    %36 = arith.addf %32, %35 : vector<8x128xf32>
    %cst_25 = arith.constant 0.000000e+00 : f32
    %37 = vector.broadcast %cst_25 : f32 to vector<8x128xf32>
    %38 = arith.maximumf %36, %37 : vector<8x128xf32>
    %c5 = arith.constant 5 : index
    %c0_26 = arith.constant 0 : index
    %c0_27 = arith.constant 0 : index
    %39 = vector.load %arg3[%c5, %c0_26, %c0_27] : memref<7x8x384xf32, #tpu.memory_space<vmem>>, vector<1x8x384xf32>
    %40 = vector.shape_cast %39 : vector<1x8x384xf32> to vector<8x384xf32>
    %41 = vector.extract_strided_slice %40 {offsets = [0, 0], sizes = [8, 128], strides = [1, 1]} : vector<8x384xf32> to vector<8x128xf32>
    %42 = arith.mulf %38, %41 : vector<8x128xf32>
    %43 = arith.truncf %42 : vector<8x128xf32> to vector<8x128xbf16>
    %c0_28 = arith.constant 0 : index
    %c0_29 = arith.constant 0 : index
    %44 = vector.load %arg6[%c0_28, %c0_29] : memref<128x128xbf16, #tpu.memory_space<vmem>>, vector<128x128xbf16>
    %cst_30 = arith.constant dense<0.000000e+00> : vector<8x128xf32>
    %45 = tpu.matmul %43, %44, %cst_30 {dimension_numbers = #tpu.dot_dimension_numbers<[1], [0], [0], [1], [0, 0, 1, 1], [], []>} : vector<8x128xbf16>, vector<128x128xbf16>, vector<8x128xf32> -> vector<8x128xf32>
    %c6 = arith.constant 6 : index
    %c0_31 = arith.constant 0 : index
    %c0_32 = arith.constant 0 : index
    %46 = vector.load %arg3[%c6, %c0_31, %c0_32] : memref<7x8x384xf32, #tpu.memory_space<vmem>>, vector<1x8x384xf32>
    %47 = vector.shape_cast %46 : vector<1x8x384xf32> to vector<8x384xf32>
    %48 = vector.extract_strided_slice %47 {offsets = [0, 0], sizes = [8, 128], strides = [1, 1]} : vector<8x384xf32> to vector<8x128xf32>
    %49 = arith.addf %45, %48 : vector<8x128xf32>
    %50 = arith.mulf %42, %42 : vector<8x128xf32>
    %cst_33 = arith.constant dense<0.000000e+00> : vector<8xf32>
    %51 = vector.multi_reduction <add>, %50, %cst_33 [1] : vector<8x128xf32> to vector<8xf32>
    %52 = vector.shape_cast %51 : vector<8xf32> to vector<8x1xf32>
    %cst_34 = arith.constant 1.000000e-24 : f32
    %53 = vector.broadcast %cst_34 : f32 to vector<8x1xf32>
    %54 = arith.maximumf %52, %53 : vector<8x1xf32>
    %55 = math.rsqrt %54 : vector<8x1xf32>
    %56 = vector.broadcast %55 : vector<8x1xf32> to vector<8x128xf32>
    %57 = arith.mulf %42, %56 : vector<8x128xf32>
    %58 = arith.addf %57, %49 : vector<8x128xf32>
    %c0_35 = arith.constant 0 : index
    %c0_36 = arith.constant 0 : index
    %59 = vector.load %arg7[%c0_35, %c0_36] : memref<8x128xf32, #tpu.memory_space<vmem>>, vector<8x128xf32>
    tpu.vector_store %arg7[%c0_35, %c0_36], %58 {strides = array<i32>} : memref<8x128xf32, #tpu.memory_space<vmem>>, vector<8x128xf32>,
    return
  }
}

</mosaic_0001>

<llo_original>
// kernel: tpu_custom_call.1
$region0: #{tpu_custom_call.1}
  #allocation0 [shape = 'u32[]', space=smem, size = 0x4, offset = 0x4, fixed_abs, tag = 'smem constant byte address 0x4 - core index']
  #allocation1 [shape = 'u32[144,128]{1,0:T(1,128)}', space=vmem, size = 0x12000, scoped, tag = 'internal scratch']
  %s0 = inlined_call_operand.vmem [shape: bf16[128,160], index: 0, kind: input, shape index: {}]
  %s1 = inlined_call_operand.hbm [shape: bf16[160,384], index: 1, kind: input, shape index: {}]
  %s2 = inlined_call_operand.hbm [shape: f32[16,384], index: 2, kind: input, shape index: {}]
  %s3 = inlined_call_operand.hbm [shape: f32[7,8,384], index: 3, kind: input, shape index: {}]
  %s4 = inlined_call_operand.vmem [shape: bf16[384,128], index: 4, kind: input, shape index: {}]
  %s5 = inlined_call_operand.hbm [shape: bf16[128,128], index: 5, kind: input, shape index: {}]
  %s6 = inlined_call_operand.hbm [shape: bf16[128,128], index: 6, kind: input, shape index: {}]
  %s7 = inlined_call_operand.hbm [shape: f32[8,128], index: 7, kind: output, shape index: {}]
  %s8 = sld [smem:[#allocation0]]
  $region58: #{tpu_custom_call.1} parent=0
    _
  %s10 = ssub.s32 1, %s8
  %s11 = scalar_select 0, %s10, %s8
  $region1: #{tpu_custom_call.1} parent=0
    #allocation2 [shape = 'u8[122880]{0}', space=vmem, size = 0x1e000, scoped, tag = 'input window, operand 1, single buffered']
    #allocation3 [shape = 's32[1]{0}', space=sflag, size = 0x4, scoped, tag = 'scoped memory for tpu_custom_call.1']
    #allocation4 [shape = 's32[1]{0}', space=sflag, size = 0x4, scoped, tag = 'scoped memory for tpu_custom_call.1']
    #allocation5 [shape = 'u8[24576]{0}', space=vmem, size = 0x6000, scoped, tag = 'input window, operand 2, single buffered']
    #allocation6 [shape = 's32[1]{0}', space=sflag, size = 0x4, scoped, tag = 'scoped memory for tpu_custom_call.1']
    #allocation7 [shape = 'u8[86016]{0}', space=vmem, size = 0x15000, scoped, tag = 'input window, operand 3, single buffered']
    #allocation8 [shape = 'u8[32768]{0}', space=vmem, size = 0x8000, scoped, tag = 'input window, operand 5, single buffered']
    #allocation9 [shape = 's32[1]{0}', space=sflag, size = 0x4, scoped, tag = 'scoped memory for tpu_custom_call.1']
    #allocation10 [shape = 'u8[32768]{0}', space=vmem, size = 0x8000, scoped, tag = 'input window, operand 6, single buffered']
    #allocation11 [shape = 'u8[4096]{0}', space=vmem, size = 0x1000, scoped, tag = 'output window, operand 0, single buffered']
    %12 = vsyncpa [#allocation3], 0
    %13 = vsyncpa [#allocation6], 0
    %14 = vsyncpa [#allocation9], 0
    %15 = vsyncpa [#allocation4], 0
    // Predicated region
    $region2: #{tpu_custom_call.1} parent=1 // pred_check
      _
    $region3: #{tpu_custom_call.1} parent=1 // pred_check_branch
      %17 = sbr.rel (0) target = $region5
    $region4: #{tpu_custom_call.1} parent=1 // pred_region
      _
    $region5: #{tpu_custom_call.1} parent=1 // pred_fallthru
      _
    // Predicated region
    $region6: #{tpu_custom_call.1} parent=1 // pred_check
      _
    $region7: #{tpu_custom_call.1} parent=1 // pred_check_branch
      %19 = sbr.rel (0) target = $region9
    $region8: #{tpu_custom_call.1} parent=1 // pred_region
      %s21 = ssub.s32 3840, 3840
      %22 = vsyncadd [#allocation3], %s21
      %s23 = sshll.u32 [#allocation2], 4
      %s24 = int_to_ptr.vmem [resolvable:$true] %s23
      %29 = dma.hbm_to_vmem [thread:$0]  %s1, 3840, %s24, [#allocation3], 192, 192, 12
    $region9: #{tpu_custom_call.1} parent=1 // pred_fallthru
      _
    // Predicated region
    $region10: #{tpu_custom_call.1} parent=1 // pred_check
      _
    $region11: #{tpu_custom_call.1} parent=1 // pred_check_branch
      %31 = sbr.rel (0) target = $region13
    $region12: #{tpu_custom_call.1} parent=1 // pred_region
      %s33 = ssub.s32 768, 768
      %34 = vsyncadd [#allocation6], %s33
      %s35 = sshll.u32 [#allocation5], 4
      %s36 = int_to_ptr.vmem [resolvable:$true] %s35
      %41 = dma.hbm_to_vmem [thread:$0]  %s2, 768, %s36, [#allocation6], 384, 384, 24
    $region13: #{tpu_custom_call.1} parent=1 // pred_fallthru
      _
    // Predicated region
    $region14: #{tpu_custom_call.1} parent=1 // pred_check
      _
    $region15: #{tpu_custom_call.1} parent=1 // pred_check_branch
      %43 = sbr.rel (0) target = $region17
    $region16: #{tpu_custom_call.1} parent=1 // pred_region
      %s45 = ssub.s32 2688, 2688
      %46 = vsyncadd [#allocation6], %s45
      %s47 = sshll.u32 [#allocation7], 4
      %s48 = int_to_ptr.vmem [resolvable:$true] %s47
      %53 = dma.hbm_to_vmem [thread:$0]  %s3, 2688, %s48, [#allocation6], 384, 384, 24
    $region17: #{tpu_custom_call.1} parent=1 // pred_fallthru
      _
    // Predicated region
    $region18: #{tpu_custom_call.1} parent=1 // pred_check
      _
    $region19: #{tpu_custom_call.1} parent=1 // pred_check_branch
      %55 = sbr.rel (0) target = $region21
    $region20: #{tpu_custom_call.1} parent=1 // pred_region
      _
    $region21: #{tpu_custom_call.1} parent=1 // pred_fallthru
      _
    // Predicated region
    $region22: #{tpu_custom_call.1} parent=1 // pred_check
      _
    $region23: #{tpu_custom_call.1} parent=1 // pred_check_branch
      %57 = sbr.rel (0) target = $region25
    $region24: #{tpu_custom_call.1} parent=1 // pred_region
      %s59 = ssub.s32 1024, 1024
      %60 = vsyncadd [#allocation9], %s59
      %s61 = sshll.u32 [#allocation8], 4
      %s62 = int_to_ptr.vmem [resolvable:$true] %s61
      %67 = dma.hbm_to_vmem [thread:$0]  %s5, 1024, %s62, [#allocation9], 64, 64, 4
    $region25: #{tpu_custom_call.1} parent=1 // pred_fallthru
      _
    // Predicated region
    $region26: #{tpu_custom_call.1} parent=1 // pred_check
      _
    $region27: #{tpu_custom_call.1} parent=1 // pred_check_branch
      %69 = sbr.rel (0) target = $region29
    $region28: #{tpu_custom_call.1} parent=1 // pred_region
      %s71 = ssub.s32 1024, 1024
      %72 = vsyncadd [#allocation9], %s71
      %s73 = sshll.u32 [#allocation10], 4
      %s74 = int_to_ptr.vmem [resolvable:$true] %s73
      %79 = dma.hbm_to_vmem [thread:$0]  %s6, 1024, %s74, [#allocation9], 64, 64, 4
    $region29: #{tpu_custom_call.1} parent=1 // pred_fallthru
      _
    // Predicated region
    $region30: #{tpu_custom_call.1} parent=1 // pred_check
      _
    $region31: #{tpu_custom_call.1} parent=1 // pred_check_branch
      %81 = sbr.rel (0) target = $region33
    $region32: #{tpu_custom_call.1} parent=1 // pred_region
      %82 = dma.done [#allocation3], 3840
    $region33: #{tpu_custom_call.1} parent=1 // pred_fallthru
      _
    // Predicated region
    $region34: #{tpu_custom_call.1} parent=1 // pred_check
      _
    $region35: #{tpu_custom_call.1} parent=1 // pred_check_branch
      %84 = sbr.rel (0) target = $region37
    $region36: #{tpu_custom_call.1} parent=1 // pred_region
      %85 = dma.done [#allocation6], 768
    $region37: #{tpu_custom_call.1} parent=1 // pred_fallthru
      _
    // Predicated region
    $region38: #{tpu_custom_call.1} parent=1 // pred_check
      _
    $region39: #{tpu_custom_call.1} parent=1 // pred_check_branch
      %87 = sbr.rel (0) target = $region41
    $region40: #{tpu_custom_call.1} parent=1 // pred_region
      %88 = dma.done [#allocation6], 2688
    $region41: #{tpu_custom_call.1} parent=1 // pred_fallthru
      _
    // Predicated region
    $region42: #{tpu_custom_call.1} parent=1 // pred_check
      _
    $region43: #{tpu_custom_call.1} parent=1 // pred_check_branch
      %90 = sbr.rel (0) target = $region45
    $region44: #{tpu_custom_call.1} parent=1 // pred_region
      %91 = dma.done [#allocation9], 1024
    $region45: #{tpu_custom_call.1} parent=1 // pred_fallthru
      _
    // Predicated region
    $region46: #{tpu_custom_call.1} parent=1 // pred_check
      _
    $region47: #{tpu_custom_call.1} parent=1 // pred_check_branch
      %93 = sbr.rel (0) target = $region49
    $region48: #{tpu_custom_call.1} parent=1 // pred_region
      %94 = dma.done [#allocation9], 1024
    $region49: #{tpu_custom_call.1} parent=1 // pred_fallthru
      _
    %v96 = vld [vmem:[%s0] sm:$0xff]
    %v97 = vld [vmem:[%s0 + $0x8] sm:$0xff]
    %v98 = vld [vmem:[%s0 + $0x10] sm:$0xff]
    %v99 = vld [vmem:[%s0 + $0x18] sm:$0xff]
    %v100 = vld [vmem:[%s0 + $0x20] sm:$0xff]
    %v101 = vld [vmem:[%s0 + $0x28] sm:$0xff]
    %v102 = vld [vmem:[%s0 + $0x30] sm:$0xff]
    %v103 = vld [vmem:[%s0 + $0x38] sm:$0xff]
    %v104 = vld [vmem:[%s0 + $0x40] sm:$0xff]
    %v105 = vld [vmem:[%s0 + $0x48] sm:$0xff]
    %v106 = vld [vmem:[%s0 + $0x50] sm:$0xff]
    %v107 = vld [vmem:[%s0 + $0x58] sm:$0xff]
    %v108 = vld [vmem:[%s0 + $0x60] sm:$0xff]
    %v109 = vld [vmem:[%s0 + $0x68] sm:$0xff]
    %v110 = vld [vmem:[%s0 + $0x70] sm:$0xff]
    %v111 = vld [vmem:[%s0 + $0x78] sm:$0xff]
    %v112 = vld [vmem:[#allocation2] sm:$0xff]
    %v113 = vld [vmem:[#allocation2 + $0x8] sm:$0xf]
    %v114 = vld [vmem:[#allocation2 + $0xc] sm:$0xff]
    %v115 = vld [vmem:[#allocation2 + $0x14] sm:$0xf]
    %v116 = vld [vmem:[#allocation2 + $0x18] sm:$0xff]
    %v117 = vld [vmem:[#allocation2 + $0x20] sm:$0xf]
    %v118 = vld [vmem:[#allocation2 + $0x24] sm:$0xff]
    %v119 = vld [vmem:[#allocation2 + $0x2c] sm:$0xf]
    %v120 = vld [vmem:[#allocation2 + $0x30] sm:$0xff]
    %v121 = vld [vmem:[#allocation2 + $0x38] sm:$0xf]
    %v122 = vld [vmem:[#allocation2 + $0x3c] sm:$0xff]
    %v123 = vld [vmem:[#allocation2 + $0x44] sm:$0xf]
    %v124 = vld [vmem:[#allocation2 + $0x48] sm:$0xff]
    %v125 = vld [vmem:[#allocation2 + $0x50] sm:$0xf]
    %v126 = vld [vmem:[#allocation2 + $0x54] sm:$0xff]
    %v127 = vld [vmem:[#allocation2 + $0x5c] sm:$0xf]
    %v128 = vld [vmem:[#allocation2 + $0x60] sm:$0xff]
    %v129 = vld [vmem:[#allocation2 + $0x68] sm:$0xf]
    %v130 = vld [vmem:[#allocation2 + $0x6c] sm:$0xff]
    %v131 = vld [vmem:[#allocation2 + $0x74] sm:$0xf]
    %v132 = vld [vmem:[#allocation2 + $0x78] sm:$0xff]
    %v133 = vld [vmem:[#allocation2 + $0x80] sm:$0xf]
    %v134 = vld [vmem:[#allocation2 + $0x84] sm:$0xff]
    %v135 = vld [vmem:[#allocation2 + $0x8c] sm:$0xf]
    %v136 = vld [vmem:[#allocation2 + $0x90] sm:$0xff]
    %v137 = vld [vmem:[#allocation2 + $0x98] sm:$0xf]
    %v138 = vld [vmem:[#allocation2 + $0x9c] sm:$0xff]
    %v139 = vld [vmem:[#allocation2 + $0xa4] sm:$0xf]
    %v140 = vld [vmem:[#allocation2 + $0xa8] sm:$0xff]
    %v141 = vld [vmem:[#allocation2 + $0xb0] sm:$0xf]
    %v142 = vld [vmem:[#allocation2 + $0xb4] sm:$0xff]
    %v143 = vld [vmem:[#allocation2 + $0xbc] sm:$0xf]
    %v144 = vld [vmem:[#allocation2 + $0xc0] sm:$0xff]
    %v145 = vld [vmem:[#allocation2 + $0xc8] sm:$0xf]
    %v146 = vld [vmem:[#allocation2 + $0xcc] sm:$0xff]
    %v147 = vld [vmem:[#allocation2 + $0xd4] sm:$0xf]
    %v148 = vld [vmem:[#allocation2 + $0xd8] sm:$0xff]
    %v149 = vld [vmem:[#allocation2 + $0xe0] sm:$0xf]
    %v150 = vld [vmem:[#allocation2 + $0xe4] sm:$0xff]
    %v151 = vld [vmem:[#allocation2 + $0xec] sm:$0xf]
    %v168 = vunpack.c.l.b16 %v96
    %v169 = vunpack.c.h.b16 %v96
    %v170 = vunpack.c.l.b16 %v97
    %v171 = vunpack.c.h.b16 %v97
    %v172 = vunpack.c.l.b16 %v98
    %v173 = vunpack.c.h.b16 %v98
    %v174 = vunpack.c.l.b16 %v99
    %v175 = vunpack.c.h.b16 %v99
    %v176 = vunpack.c.l.b16 %v100
    %v177 = vunpack.c.h.b16 %v100
    %v178 = vunpack.c.l.b16 %v101
    %v179 = vunpack.c.h.b16 %v101
    %v180 = vunpack.c.l.b16 %v102
    %v181 = vunpack.c.h.b16 %v102
    %v182 = vunpack.c.l.b16 %v103
    %v183 = vunpack.c.h.b16 %v103
    %v184 = vunpack.c.l.b16 %v104
    %v185 = vunpack.c.h.b16 %v104
    %v186 = vunpack.c.l.b16 %v105
    %v187 = vunpack.c.h.b16 %v105
    %v188 = vunpack.c.l.b16 %v106
    %v189 = vunpack.c.h.b16 %v106
    %v190 = vunpack.c.l.b16 %v107
    %v191 = vunpack.c.h.b16 %v107
    %v192 = vunpack.c.l.b16 %v108
    %v193 = vunpack.c.h.b16 %v108
    %v194 = vunpack.c.l.b16 %v109
    %v195 = vunpack.c.h.b16 %v109
    %v196 = vunpack.c.l.b16 %v110
    %v197 = vunpack.c.h.b16 %v110
    %v198 = vunpack.c.l.b16 %v111
    %v199 = vunpack.c.h.b16 %v111
    %v200 = vpack.c.b16 %v170, %v168
    %v201 = vpack.c.b16 %v171, %v169
    %v202 = vpack.c.b16 %v174, %v172
    %v203 = vpack.c.b16 %v175, %v173
    %v204 = vpack.c.b16 %v178, %v176
    %v205 = vpack.c.b16 %v179, %v177
    %v206 = vpack.c.b16 %v182, %v180
    %v207 = vpack.c.b16 %v183, %v181
    %v208 = vpack.c.b16 %v186, %v184
    %v209 = vpack.c.b16 %v187, %v185
    %v210 = vpack.c.b16 %v190, %v188
    %v211 = vpack.c.b16 %v191, %v189
    %v212 = vpack.c.b16 %v194, %v192
    %v213 = vpack.c.b16 %v195, %v193
    %v214 = vpack.c.b16 %v198, %v196
    %v215 = vpack.c.b16 %v199, %v197
    %v264 = vunpack.c.l.b16 %v112
    %v265 = vunpack.c.h.b16 %v112
    %v266 = vunpack.c.l.b16 %v113
    %v267 = vunpack.c.l.b16 %v114
    %v268 = vunpack.c.h.b16 %v114
    %v269 = vunpack.c.l.b16 %v115
    %v270 = vunpack.c.l.b16 %v116
    %v271 = vunpack.c.h.b16 %v116
    %v272 = vunpack.c.l.b16 %v117
    %v273 = vunpack.c.l.b16 %v118
    %v274 = vunpack.c.h.b16 %v118
    %v275 = vunpack.c.l.b16 %v119
    %v276 = vunpack.c.l.b16 %v120
    %v277 = vunpack.c.h.b16 %v120
    %v278 = vunpack.c.l.b16 %v121
    %v279 = vunpack.c.l.b16 %v122
    %v280 = vunpack.c.h.b16 %v122
    %v281 = vunpack.c.l.b16 %v123
    %v282 = vunpack.c.l.b16 %v124
    %v283 = vunpack.c.h.b16 %v124
    %v284 = vunpack.c.l.b16 %v125
    %v285 = vunpack.c.l.b16 %v126
    %v286 = vunpack.c.h.b16 %v126
    %v287 = vunpack.c.l.b16 %v127
    %v288 = vunpack.c.l.b16 %v128
    %v289 = vunpack.c.h.b16 %v128
    %v290 = vunpack.c.l.b16 %v129
    %v291 = vunpack.c.l.b16 %v130
    %v292 = vunpack.c.h.b16 %v130
    %v293 = vunpack.c.l.b16 %v131
    %v294 = vunpack.c.l.b16 %v132
    %v295 = vunpack.c.h.b16 %v132
    %v296 = vunpack.c.l.b16 %v133
    %v297 = vunpack.c.l.b16 %v134
    %v298 = vunpack.c.h.b16 %v134
    %v299 = vunpack.c.l.b16 %v135
    %v300 = vunpack.c.l.b16 %v136
    %v301 = vunpack.c.h.b16 %v136
    %v302 = vunpack.c.l.b16 %v137
    %v303 = vunpack.c.l.b16 %v138
    %v304 = vunpack.c.h.b16 %v138
    %v305 = vunpack.c.l.b16 %v139
    %v306 = vunpack.c.l.b16 %v140
    %v307 = vunpack.c.h.b16 %v140
    %v308 = vunpack.c.l.b16 %v141
    %v309 = vunpack.c.l.b16 %v142
    %v310 = vunpack.c.h.b16 %v142
    %v311 = vunpack.c.l.b16 %v143
    %v312 = vunpack.c.l.b16 %v144
    %v313 = vunpack.c.h.b16 %v144
    %v314 = vunpack.c.l.b16 %v145
    %v315 = vunpack.c.l.b16 %v146
    %v316 = vunpack.c.h.b16 %v146
    %v317 = vunpack.c.l.b16 %v147
    %v318 = vunpack.c.l.b16 %v148
    %v319 = vunpack.c.h.b16 %v148
    %v320 = vunpack.c.l.b16 %v149
    %v321 = vunpack.c.l.b16 %v150
    %v322 = vunpack.c.h.b16 %v150
    %v323 = vunpack.c.l.b16 %v151
    %v324 = vpack.c.b16 %v267, %v264
    %v325 = vpack.c.b16 %v268, %v265
    %v326 = vpack.c.b16 %v269, %v266
    %v327 = vpack.c.b16 %v273, %v270
    %v328 = vpack.c.b16 %v274, %v271
    %v329 = vpack.c.b16 %v275, %v272
    %v330 = vpack.c.b16 %v279, %v276
    %v331 = vpack.c.b16 %v280, %v277
    %v332 = vpack.c.b16 %v281, %v278
    %v333 = vpack.c.b16 %v285, %v282
    %v334 = vpack.c.b16 %v286, %v283
    %v335 = vpack.c.b16 %v287, %v284
    %v336 = vpack.c.b16 %v291, %v288
    %v337 = vpack.c.b16 %v292, %v289
    %v338 = vpack.c.b16 %v293, %v290
    %v339 = vpack.c.b16 %v297, %v294
    %v340 = vpack.c.b16 %v298, %v295
    %v341 = vpack.c.b16 %v299, %v296
    %v342 = vpack.c.b16 %v303, %v300
    %v343 = vpack.c.b16 %v304, %v301
    %v344 = vpack.c.b16 %v305, %v302
    %v345 = vpack.c.b16 %v309, %v306
    %v346 = vpack.c.b16 %v310, %v307
    %v347 = vpack.c.b16 %v311, %v308
    %v348 = vpack.c.b16 %v315, %v312
    %v349 = vpack.c.b16 %v316, %v313
    %v350 = vpack.c.b16 %v317, %v314
    %v351 = vpack.c.b16 %v321, %v318
    %v352 = vpack.c.b16 %v322, %v319
    %v353 = vpack.c.b16 %v323, %v320
    %vm384 = vcmask 261120
    %v386 = vsel %vm384, %v201, 0
    %v389 = vsel %vm384, %v203, 0
    %v392 = vsel %vm384, %v205, 0
    %v395 = vsel %vm384, %v207, 0
    %v398 = vsel %vm384, %v209, 0
    %v401 = vsel %vm384, %v211, 0
    %v404 = vsel %vm384, %v213, 0
    %v407 = vsel %vm384, %v215, 0
    %409 = vmatprep.subr.bf16.mxu0 %v325
    %410 = vmatpush1.bf16.msra.mxu0 %v324
    %411 = vmatprep.subr.bf16.mxu0 %v328
    %412 = vmatpush1.bf16.msra.mxu0 %v327
    %413 = vmatprep.subr.bf16.mxu0 %v331
    %414 = vmatpush1.bf16.msra.mxu0 %v330
    %415 = vmatprep.subr.bf16.mxu0 %v334
    %416 = vmatpush1.bf16.msra.mxu0 %v333
    %417 = vmatprep.subr.bf16.mxu0 %v337
    %418 = vmatpush1.bf16.msra.mxu0 %v336
    %419 = vmatprep.subr.bf16.mxu0 %v340
    %420 = vmatpush1.bf16.msra.mxu0 %v339
    %421 = vmatprep.subr.bf16.mxu0 %v343
    %422 = vmatpush1.bf16.msra.mxu0 %v342
    %423 = vmatprep.subr.bf16.mxu0 %v346
    %424 = vmatpush1.bf16.msra.mxu0 %v345
    %425 = vmatprep.subr.bf16.mxu0 %v349
    %426 = vmatpush1.bf16.msra.mxu0 %v348
    %427 = vmatprep.subr.bf16.mxu0 %v352
    %428 = vmatpush1.bf16.msra.mxu0 %v351
    %429 = vmatprep.subr.bf16.mxu0 0
    %430 = vmatpush1.bf16.msra.mxu0 0
    %431 = vmatprep.subr.bf16.mxu0 0
    %432 = vmatpush1.bf16.msra.mxu0 0
    %433 = vmatprep.subr.bf16.mxu0 0
    %434 = vmatpush1.bf16.msra.mxu0 0
    %435 = vmatprep.subr.bf16.mxu0 0
    %436 = vmatpush1.bf16.msra.mxu0 0
    %437 = vmatprep.subr.bf16.mxu0 0
    %438 = vmatpush1.bf16.msra.mxu0 0
    %439 = vmatprep.subr.bf16.mxu0 0
    %440 = vmatpush1.bf16.msra.mxu0 0
    %441 = vmatprep.mubr.bf16.mxu0 %v386
    %442 = vmatmul.mubr.bf16.gmra.mrb[0].mxu0 %v200
    %v443 = vpop.f32.mrb[0].mxu0
    %v444 = vadd.f32 0.0, %v443
    %v445 = vpop.f32.mrb[0].mxu0
    %v446 = vadd.f32 0.0, %v445
    %v447 = vpop.f32.mrb[0].mxu0
    %v448 = vadd.f32 0.0, %v447
    %v449 = vpop.f32.mrb[0].mxu0
    %v450 = vadd.f32 0.0, %v449
    %451 = vmatprep.mubr.bf16.mxu0 %v389
    %452 = vmatmul.mubr.bf16.gmra.mrb[0].mxu0 %v202
    %v453 = vpop.f32.mrb[0].mxu0
    %v454 = vadd.f32 0.0, %v453
    %v455 = vpop.f32.mrb[0].mxu0
    %v456 = vadd.f32 0.0, %v455
    %v457 = vpop.f32.mrb[0].mxu0
    %v458 = vadd.f32 0.0, %v457
    %v459 = vpop.f32.mrb[0].mxu0
    %v460 = vadd.f32 0.0, %v459
    %461 = vmatprep.mubr.bf16.mxu0 %v392
    %462 = vmatmul.mubr.bf16.gmra.mrb[0].mxu0 %v204
    %v463 = vpop.f32.mrb[0].mxu0
    %v464 = vadd.f32 0.0, %v463
    %v465 = vpop.f32.mrb[0].mxu0
    %v466 = vadd.f32 0.0, %v465
    %v467 = vpop.f32.mrb[0].mxu0
    %v468 = vadd.f32 0.0, %v467
    %v469 = vpop.f32.mrb[0].mxu0
    %v470 = vadd.f32 0.0, %v469
    %471 = vmatprep.mubr.bf16.mxu0 %v395
    %472 = vmatmul.mubr.bf16.gmra.mrb[0].mxu0 %v206
    %v473 = vpop.f32.mrb[0].mxu0
    %v474 = vadd.f32 0.0, %v473
    %v475 = vpop.f32.mrb[0].mxu0
    %v476 = vadd.f32 0.0, %v475
    %v477 = vpop.f32.mrb[0].mxu0
    %v478 = vadd.f32 0.0, %v477
    %v479 = vpop.f32.mrb[0].mxu0
    %v480 = vadd.f32 0.0, %v479
    %481 = vmatprep.mubr.bf16.mxu0 %v398
    %482 = vmatmul.mubr.bf16.gmra.mrb[0].mxu0 %v208
    %v483 = vpop.f32.mrb[0].mxu0
    %v484 = vadd.f32 0.0, %v483
    %v485 = vpop.f32.mrb[0].mxu0
    %v486 = vadd.f32 0.0, %v485
    %v487 = vpop.f32.mrb[0].mxu0
    %v488 = vadd.f32 0.0, %v487
    %v489 = vpop.f32.mrb[0].mxu0
    %v490 = vadd.f32 0.0, %v489
    %491 = vmatprep.mubr.bf16.mxu0 %v401
    %492 = vmatmul.mubr.bf16.gmra.mrb[0].mxu0 %v210
    %v493 = vpop.f32.mrb[0].mxu0
    %v494 = vadd.f32 0.0, %v493
    %v495 = vpop.f32.mrb[0].mxu0
    %v496 = vadd.f32 0.0, %v495
    %v497 = vpop.f32.mrb[0].mxu0
    %v498 = vadd.f32 0.0, %v497
    %v499 = vpop.f32.mrb[0].mxu0
    %v500 = vadd.f32 0.0, %v499
    %501 = vmatprep.mubr.bf16.mxu0 %v404
    %502 = vmatmul.mubr.bf16.gmra.mrb[0].mxu0 %v212
    %v503 = vpop.f32.mrb[0].mxu0
    %v504 = vadd.f32 0.0, %v503
    %v505 = vpop.f32.mrb[0].mxu0
    %v506 = vadd.f32 0.0, %v505
    %v507 = vpop.f32.mrb[0].mxu0
    %v508 = vadd.f32 0.0, %v507
    %v509 = vpop.f32.mrb[0].mxu0
    %v510 = vadd.f32 0.0, %v509
    %511 = vmatprep.mubr.bf16.mxu0 %v407
    %512 = vmatmul.mubr.bf16.gmra.mrb[0].mxu0 %v214
    %v513 = vpop.f32.mrb[0].mxu0
    %v514 = vadd.f32 0.0, %v513
    %v515 = vpop.f32.mrb[0].mxu0
    %v516 = vadd.f32 0.0, %v515
    %v517 = vpop.f32.mrb[0].mxu0
    %v518 = vadd.f32 0.0, %v517
    %v519 = vpop.f32.mrb[0].mxu0
    %v520 = vadd.f32 0.0, %v519
    %521 = vdwg.mxu0
    %522 = vmatprep.subr.bf16.mxu0 0
    %523 = vmatpush1.bf16.msra.mxu0 %v326
    %524 = vmatprep.subr.bf16.mxu0 0
    %525 = vmatpush1.bf16.msra.mxu0 %v329
    %526 = vmatprep.subr.bf16.mxu0 0
    %527 = vmatpush1.bf16.msra.mxu0 %v332
    %528 = vmatprep.subr.bf16.mxu0 0
    %529 = vmatpush1.bf16.msra.mxu0 %v335
    %530 = vmatprep.subr.bf16.mxu0 0
    %531 = vmatpush1.bf16.msra.mxu0 %v338
    %532 = vmatprep.subr.bf16.mxu0 0
    %533 = vmatpush1.bf16.msra.mxu0 %v341
    %534 = vmatprep.subr.bf16.mxu0 0
    %535 = vmatpush1.bf16.msra.mxu0 %v344
    %536 = vmatprep.subr.bf16.mxu0 0
    %537 = vmatpush1.bf16.msra.mxu0 %v347
    %538 = vmatprep.subr.bf16.mxu0 0
    %539 = vmatpush1.bf16.msra.mxu0 %v350
    %540 = vmatprep.subr.bf16.mxu0 0
    %541 = vmatpush1.bf16.msra.mxu0 %v353
    %542 = vmatprep.subr.bf16.mxu0 0
    %543 = vmatpush1.bf16.msra.mxu0 0
    %544 = vmatprep.subr.bf16.mxu0 0
    %545 = vmatpush1.bf16.msra.mxu0 0
    %546 = vmatprep.subr.bf16.mxu0 0
    %547 = vmatpush1.bf16.msra.mxu0 0
    %548 = vmatprep.subr.bf16.mxu0 0
    %549 = vmatpush1.bf16.msra.mxu0 0
    %550 = vmatprep.subr.bf16.mxu0 0
    %551 = vmatpush1.bf16.msra.mxu0 0
    %552 = vmatprep.subr.bf16.mxu0 0
    %553 = vmatpush1.bf16.msra.mxu0 0
    %554 = vmatprep.mubr.bf16.mxu0 %v386
    %555 = vmatmul.mubr.bf16.gmra.mrb[0].mxu0 %v200
    %v556 = vpop.f32.mrb[0].mxu0
    %v557 = vadd.f32 0.0, %v556
    %v558 = vpop.f32.mrb[0].mxu0
    %v559 = vpop.f32.mrb[0].mxu0
    %v560 = vadd.f32 0.0, %v559
    %v561 = vpop.f32.mrb[0].mxu0
    %562 = vmatprep.mubr.bf16.mxu0 %v389
    %563 = vmatmul.mubr.bf16.gmra.mrb[0].mxu0 %v202
    %v564 = vpop.f32.mrb[0].mxu0
    %v565 = vadd.f32 0.0, %v564
    %v566 = vpop.f32.mrb[0].mxu0
    %v567 = vpop.f32.mrb[0].mxu0
    %v568 = vadd.f32 0.0, %v567
    %v569 = vpop.f32.mrb[0].mxu0
    %570 = vmatprep.mubr.bf16.mxu0 %v392
    %571 = vmatmul.mubr.bf16.gmra.mrb[0].mxu0 %v204
    %v572 = vpop.f32.mrb[0].mxu0
    %v573 = vadd.f32 0.0, %v572
    %v574 = vpop.f32.mrb[0].mxu0
    %v575 = vpop.f32.mrb[0].mxu0
    %v576 = vadd.f32 0.0, %v575
    %v577 = vpop.f32.mrb[0].mxu0
    %578 = vmatprep.mubr.bf16.mxu0 %v395
    %579 = vmatmul.mubr.bf16.gmra.mrb[0].mxu0 %v206
    %v580 = vpop.f32.mrb[0].mxu0
    %v581 = vadd.f32 0.0, %v580
    %v582 = vpop.f32.mrb[0].mxu0
    %v583 = vpop.f32.mrb[0].mxu0
    %v584 = vadd.f32 0.0, %v583
    %v585 = vpop.f32.mrb[0].mxu0
    %586 = vmatprep.mubr.bf16.mxu0 %v398
    %587 = vmatmul.mubr.bf16.gmra.mrb[0].mxu0 %v208
    %v588 = vpop.f32.mrb[0].mxu0
    %v589 = vadd.f32 0.0, %v588
    %v590 = vpop.f32.mrb[0].mxu0
    %v591 = vpop.f32.mrb[0].mxu0
    %v592 = vadd.f32 0.0, %v591
    %v593 = vpop.f32.mrb[0].mxu0
    %594 = vmatprep.mubr.bf16.mxu0 %v401
    %595 = vmatmul.mubr.bf16.gmra.mrb[0].mxu0 %v210
    %v596 = vpop.f32.mrb[0].mxu0
    %v597 = vadd.f32 0.0, %v596
    %v598 = vpop.f32.mrb[0].mxu0
    %v599 = vpop.f32.mrb[0].mxu0
    %v600 = vadd.f32 0.0, %v599
    %v601 = vpop.f32.mrb[0].mxu0
    %602 = vmatprep.mubr.bf16.mxu0 %v404
    %603 = vmatmul.mubr.bf16.gmra.mrb[0].mxu0 %v212
    %v604 = vpop.f32.mrb[0].mxu0
    %v605 = vadd.f32 0.0, %v604
    %v606 = vpop.f32.mrb[0].mxu0
    %v607 = vpop.f32.mrb[0].mxu0
    %v608 = vadd.f32 0.0, %v607
    %v609 = vpop.f32.mrb[0].mxu0
    %610 = vmatprep.mubr.bf16.mxu0 %v407
    %611 = vmatmul.mubr.bf16.gmra.mrb[0].mxu0 %v214
    %v612 = vpop.f32.mrb[0].mxu0
    %v613 = vadd.f32 0.0, %v612
    %v614 = vpop.f32.mrb[0].mxu0
    %v615 = vpop.f32.mrb[0].mxu0
    %v616 = vadd.f32 0.0, %v615
    %v617 = vpop.f32.mrb[0].mxu0
    %618 = vdwg.mxu0
    %v619 = vld [vmem:[#allocation5] sm:$0xff]
    %v620 = vld [vmem:[#allocation5 + $0x8] sm:$0xff]
    %v621 = vld [vmem:[#allocation5 + $0x10] sm:$0xff]
    %v622 = vld [vmem:[#allocation5 + $0x18] sm:$0xff]
    %v623 = vld [vmem:[#allocation5 + $0x20] sm:$0xff]
    %v624 = vld [vmem:[#allocation5 + $0x28] sm:$0xff]
    %v625 = vadd.f32 %v444, %v619
    %v626 = vadd.f32 %v446, %v620
    %v627 = vadd.f32 %v557, %v621
    %v628 = vadd.f32 %v448, %v622
    %v629 = vadd.f32 %v450, %v623
    %v630 = vadd.f32 %v560, %v624
    %v631 = vadd.f32 %v454, %v619
    %v632 = vadd.f32 %v456, %v620
    %v633 = vadd.f32 %v565, %v621
    %v634 = vadd.f32 %v458, %v622
    %v635 = vadd.f32 %v460, %v623
    %v636 = vadd.f32 %v568, %v624
    %v637 = vadd.f32 %v464, %v619
    %v638 = vadd.f32 %v466, %v620
    %v639 = vadd.f32 %v573, %v621
    %v640 = vadd.f32 %v468, %v622
    %v641 = vadd.f32 %v470, %v623
    %v642 = vadd.f32 %v576, %v624
    %v643 = vadd.f32 %v474, %v619
    %v644 = vadd.f32 %v476, %v620
    %v645 = vadd.f32 %v581, %v621
    %v646 = vadd.f32 %v478, %v622
    %v647 = vadd.f32 %v480, %v623
    %v648 = vadd.f32 %v584, %v624
    %v649 = vadd.f32 %v484, %v619
    %v650 = vadd.f32 %v486, %v620
    %v651 = vadd.f32 %v589, %v621
    %v652 = vadd.f32 %v488, %v622
    %v653 = vadd.f32 %v490, %v623
    %v654 = vadd.f32 %v592, %v624
    %v655 = vadd.f32 %v494, %v619
    %v656 = vadd.f32 %v496, %v620
    %v657 = vadd.f32 %v597, %v621
    %v658 = vadd.f32 %v498, %v622
    %v659 = vadd.f32 %v500, %v623
    %v660 = vadd.f32 %v600, %v624
    %v661 = vadd.f32 %v504, %v619
    %v662 = vadd.f32 %v506, %v620
    %v663 = vadd.f32 %v605, %v621
    %v664 = vadd.f32 %v508, %v622
    %v665 = vadd.f32 %v510, %v623
    %v666 = vadd.f32 %v608, %v624
    %v667 = vadd.f32 %v514, %v619
    %v668 = vadd.f32 %v516, %v620
    %v669 = vadd.f32 %v613, %v621
    %v670 = vadd.f32 %v518, %v622
    %v671 = vadd.f32 %v520, %v623
    %v672 = vadd.f32 %v616, %v624
    %v673 = vmax.f32 %v625, %v628
    %v674 = vrot.slane %v673, 4
    %v675 = vmax.f32 %v673, %v674
    %v676 = vrot.slane %v675, 2
    %v677 = vmax.f32 %v675, %v676
    %v678 = vrot.slane %v677, 1
    %v679 = vmax.f32 %v677, %v678
    %v680 = vmax.f32 %v626, %v629
    %v681 = vrot.slane %v680, 4
    %v682 = vmax.f32 %v680, %v681
    %v683 = vrot.slane %v682, 2
    %v684 = vmax.f32 %v682, %v683
    %v685 = vrot.slane %v684, 1
    %v686 = vmax.f32 %v684, %v685
    %v687 = vmax.f32 %v627, %v630
    %v688 = vrot.slane %v687, 4
    %v689 = vmax.f32 %v687, %v688
    %v690 = vrot.slane %v689, 2
    %v691 = vmax.f32 %v689, %v690
    %v692 = vrot.slane %v691, 1
    %v693 = vmax.f32 %v691, %v692
    %v694 = vmax.f32 %v631, %v634
    %v695 = vrot.slane %v694, 4
    %v696 = vmax.f32 %v694, %v695
    %v697 = vrot.slane %v696, 2
    %v698 = vmax.f32 %v696, %v697
    %v699 = vrot.slane %v698, 1
    %v700 = vmax.f32 %v698, %v699
    %v701 = vmax.f32 %v632, %v635
    %v702 = vrot.slane %v701, 4
    %v703 = vmax.f32 %v701, %v702
    %v704 = vrot.slane %v703, 2
    %v705 = vmax.f32 %v703, %v704
    %v706 = vrot.slane %v705, 1
    %v707 = vmax.f32 %v705, %v706
    %v708 = vmax.f32 %v633, %v636
    %v709 = vrot.slane %v708, 4
    %v710 = vmax.f32 %v708, %v709
    %v711 = vrot.slane %v710, 2
    %v712 = vmax.f32 %v710, %v711
    %v713 = vrot.slane %v712, 1
    %v714 = vmax.f32 %v712, %v713
    %v715 = vmax.f32 %v637, %v640
    %v716 = vrot.slane %v715, 4
    %v717 = vmax.f32 %v715, %v716
    %v718 = vrot.slane %v717, 2
    %v719 = vmax.f32 %v717, %v718
    %v720 = vrot.slane %v719, 1
    %v721 = vmax.f32 %v719, %v720
    %v722 = vmax.f32 %v638, %v641
    %v723 = vrot.slane %v722, 4
    %v724 = vmax.f32 %v722, %v723
    %v725 = vrot.slane %v724, 2
    %v726 = vmax.f32 %v724, %v725
    %v727 = vrot.slane %v726, 1
    %v728 = vmax.f32 %v726, %v727
    %v729 = vmax.f32 %v639, %v642
    %v730 = vrot.slane %v729, 4
    %v731 = vmax.f32 %v729, %v730
    %v732 = vrot.slane %v731, 2
    %v733 = vmax.f32 %v731, %v732
    %v734 = vrot.slane %v733, 1
    %v735 = vmax.f32 %v733, %v734
    %v736 = vmax.f32 %v643, %v646
    %v737 = vrot.slane %v736, 4
    %v738 = vmax.f32 %v736, %v737
    %v739 = vrot.slane %v738, 2
    %v740 = vmax.f32 %v738, %v739
    %v741 = vrot.slane %v740, 1
    %v742 = vmax.f32 %v740, %v741
    %v743 = vmax.f32 %v644, %v647
    %v744 = vrot.slane %v743, 4
    %v745 = vmax.f32 %v743, %v744
    %v746 = vrot.slane %v745, 2
    %v747 = vmax.f32 %v745, %v746
    %v748 = vrot.slane %v747, 1
    %v749 = vmax.f32 %v747, %v748
    %v750 = vmax.f32 %v645, %v648
    %v751 = vrot.slane %v750, 4
    %v752 = vmax.f32 %v750, %v751
    %v753 = vrot.slane %v752, 2
    %v754 = vmax.f32 %v752, %v753
    %v755 = vrot.slane %v754, 1
    %v756 = vmax.f32 %v754, %v755
    %v757 = vmax.f32 %v649, %v652
    %v758 = vrot.slane %v757, 4
    %v759 = vmax.f32 %v757, %v758
    %v760 = vrot.slane %v759, 2
    %v761 = vmax.f32 %v759, %v760
    %v762 = vrot.slane %v761, 1
    %v763 = vmax.f32 %v761, %v762
    %v764 = vmax.f32 %v650, %v653
    %v765 = vrot.slane %v764, 4
    %v766 = vmax.f32 %v764, %v765
    %v767 = vrot.slane %v766, 2
    %v768 = vmax.f32 %v766, %v767
    %v769 = vrot.slane %v768, 1
    %v770 = vmax.f32 %v768, %v769
    %v771 = vmax.f32 %v651, %v654
    %v772 = vrot.slane %v771, 4
    %v773 = vmax.f32 %v771, %v772
    %v774 = vrot.slane %v773, 2
    %v775 = vmax.f32 %v773, %v774
    %v776 = vrot.slane %v775, 1
    %v777 = vmax.f32 %v775, %v776
    %v778 = vmax.f32 %v655, %v658
    %v779 = vrot.slane %v778, 4
    %v780 = vmax.f32 %v778, %v779
    %v781 = vrot.slane %v780, 2
    %v782 = vmax.f32 %v780, %v781
    %v783 = vrot.slane %v782, 1
    %v784 = vmax.f32 %v782, %v783
    %v785 = vmax.f32 %v656, %v659
    %v786 = vrot.slane %v785, 4
    %v787 = vmax.f32 %v785, %v786
    %v788 = vrot.slane %v787, 2
    %v789 = vmax.f32 %v787, %v788
    %v790 = vrot.slane %v789, 1
    %v791 = vmax.f32 %v789, %v790
    %v792 = vmax.f32 %v657, %v660
    %v793 = vrot.slane %v792, 4
    %v794 = vmax.f32 %v792, %v793
    %v795 = vrot.slane %v794, 2
    %v796 = vmax.f32 %v794, %v795
    %v797 = vrot.slane %v796, 1
    %v798 = vmax.f32 %v796, %v797
    %v799 = vmax.f32 %v661, %v664
    %v800 = vrot.slane %v799, 4
    %v801 = vmax.f32 %v799, %v800
    %v802 = vrot.slane %v801, 2
    %v803 = vmax.f32 %v801, %v802
    %v804 = vrot.slane %v803, 1
    %v805 = vmax.f32 %v803, %v804
    %v806 = vmax.f32 %v662, %v665
    %v807 = vrot.slane %v806, 4
    %v808 = vmax.f32 %v806, %v807
    %v809 = vrot.slane %v808, 2
    %v810 = vmax.f32 %v808, %v809
    %v811 = vrot.slane %v810, 1
    %v812 = vmax.f32 %v810, %v811
    %v813 = vmax.f32 %v663, %v666
    %v814 = vrot.slane %v813, 4
    %v815 = vmax.f32 %v813, %v814
    %v816 = vrot.slane %v815, 2
    %v817 = vmax.f32 %v815, %v816
    %v818 = vrot.slane %v817, 1
    %v819 = vmax.f32 %v817, %v818
    %v820 = vmax.f32 %v667, %v670
    %v821 = vrot.slane %v820, 4
    %v822 = vmax.f32 %v820, %v821
    %v823 = vrot.slane %v822, 2
    %v824 = vmax.f32 %v822, %v823
    %v825 = vrot.slane %v824, 1
    %v826 = vmax.f32 %v824, %v825
    %v827 = vmax.f32 %v668, %v671
    %v828 = vrot.slane %v827, 4
    %v829 = vmax.f32 %v827, %v828
    %v830 = vrot.slane %v829, 2
    %v831 = vmax.f32 %v829, %v830
    %v832 = vrot.slane %v831, 1
    %v833 = vmax.f32 %v831, %v832
    %v834 = vmax.f32 %v669, %v672
    %v835 = vrot.slane %v834, 4
    %v836 = vmax.f32 %v834, %v835
    %v837 = vrot.slane %v836, 2
    %v838 = vmax.f32 %v836, %v837
    %v839 = vrot.slane %v838, 1
    %v840 = vmax.f32 %v838, %v839
    %v841 = vld [vmem:[#allocation7] sm:$0xff]
    %v842 = vld [vmem:[#allocation7 + $0x8] sm:$0xff]
    %v843 = vld [vmem:[#allocation7 + $0x10] sm:$0xff]
    %v847 = vrot.slane %v841, 1
    %v848 = vrot.slane %v842, 1
    %v849 = vrot.slane %v843, 1
    %v850 = vrot.slane %v841, 2
    %v851 = vrot.slane %v842, 2
    %v852 = vrot.slane %v843, 2
    %v853 = vrot.slane %v841, 3
    %v854 = vrot.slane %v842, 3
    %v855 = vrot.slane %v843, 3
    %v856 = vrot.slane %v841, 4
    %v857 = vrot.slane %v842, 4
    %v858 = vrot.slane %v843, 4
    %v859 = vrot.slane %v841, 5
    %v860 = vrot.slane %v842, 5
    %v861 = vrot.slane %v843, 5
    %v862 = vrot.slane %v841, 6
    %v863 = vrot.slane %v842, 6
    %v864 = vrot.slane %v843, 6
    %v865 = vrot.slane %v841, 7
    %v866 = vrot.slane %v842, 7
    %v867 = vrot.slane %v843, 7
    %v892 = vadd.f32 %v679, %v841
    %v893 = vadd.f32 %v686, %v842
    %v894 = vadd.f32 %v693, %v843
    %v895 = vadd.f32 %v700, %v847
    %v896 = vadd.f32 %v707, %v848
    %v897 = vadd.f32 %v714, %v849
    %v898 = vadd.f32 %v721, %v850
    %v899 = vadd.f32 %v728, %v851
    %v900 = vadd.f32 %v735, %v852
    %v901 = vadd.f32 %v742, %v853
    %v902 = vadd.f32 %v749, %v854
    %v903 = vadd.f32 %v756, %v855
    %v904 = vadd.f32 %v763, %v856
    %v905 = vadd.f32 %v770, %v857
    %v906 = vadd.f32 %v777, %v858
    %v907 = vadd.f32 %v784, %v859
    %v908 = vadd.f32 %v791, %v860
    %v909 = vadd.f32 %v798, %v861
    %v910 = vadd.f32 %v805, %v862
    %v911 = vadd.f32 %v812, %v863
    %v912 = vadd.f32 %v819, %v864
    %v913 = vadd.f32 %v826, %v865
    %v914 = vadd.f32 %v833, %v866
    %v915 = vadd.f32 %v840, %v867
    %v916 = vmax.f32 %v892, 0.0
    %v917 = vmax.f32 %v893, 0.0
    %v918 = vmax.f32 %v894, 0.0
    %v919 = vmax.f32 %v895, 0.0
    %v920 = vmax.f32 %v896, 0.0
    %v921 = vmax.f32 %v897, 0.0
    %v922 = vmax.f32 %v898, 0.0
    %v923 = vmax.f32 %v899, 0.0
    %v924 = vmax.f32 %v900, 0.0
    %v925 = vmax.f32 %v901, 0.0
    %v926 = vmax.f32 %v902, 0.0
    %v927 = vmax.f32 %v903, 0.0
    %v928 = vmax.f32 %v904, 0.0
    %v929 = vmax.f32 %v905, 0.0
    %v930 = vmax.f32 %v906, 0.0
    %v931 = vmax.f32 %v907, 0.0
    %v932 = vmax.f32 %v908, 0.0
    %v933 = vmax.f32 %v909, 0.0
    %v934 = vmax.f32 %v910, 0.0
    %v935 = vmax.f32 %v911, 0.0
    %v936 = vmax.f32 %v912, 0.0
    %v937 = vmax.f32 %v913, 0.0
    %v938 = vmax.f32 %v914, 0.0
    %v939 = vmax.f32 %v915, 0.0
    %s940 = scalar_lea.vmem [#allocation7], 24
    %v941 = vld [vmem:[%s940] sm:$0xff]
    %v942 = vld [vmem:[%s940 + $0x8] sm:$0xff]
    %v943 = vld [vmem:[%s940 + $0x10] sm:$0xff]
    %v947 = vrot.slane %v941, 1
    %v948 = vrot.slane %v942, 1
    %v949 = vrot.slane %v943, 1
    %v950 = vrot.slane %v941, 2
    %v951 = vrot.slane %v942, 2
    %v952 = vrot.slane %v943, 2
    %v953 = vrot.slane %v941, 3
    %v954 = vrot.slane %v942, 3
    %v955 = vrot.slane %v943, 3
    %v956 = vrot.slane %v941, 4
    %v957 = vrot.slane %v942, 4
    %v958 = vrot.slane %v943, 4
    %v959 = vrot.slane %v941, 5
    %v960 = vrot.slane %v942, 5
    %v961 = vrot.slane %v943, 5
    %v962 = vrot.slane %v941, 6
    %v963 = vrot.slane %v942, 6
    %v964 = vrot.slane %v943, 6
    %v965 = vrot.slane %v941, 7
    %v966 = vrot.slane %v942, 7
    %v967 = vrot.slane %v943, 7
    %v992 = vmul.f32 %v916, %v941
    %v993 = vmul.f32 %v917, %v942
    %v994 = vmul.f32 %v918, %v943
    %v995 = vmul.f32 %v919, %v947
    %v996 = vmul.f32 %v920, %v948
    %v997 = vmul.f32 %v921, %v949
    %v998 = vmul.f32 %v922, %v950
    %v999 = vmul.f32 %v923, %v951
    %v1000 = vmul.f32 %v924, %v952
    %v1001 = vmul.f32 %v925, %v953
    %v1002 = vmul.f32 %v926, %v954
    %v1003 = vmul.f32 %v927, %v955
    %v1004 = vmul.f32 %v928, %v956
    %v1005 = vmul.f32 %v929, %v957
    %v1006 = vmul.f32 %v930, %v958
    %v1007 = vmul.f32 %v931, %v959
    %v1008 = vmul.f32 %v932, %v960
    %v1009 = vmul.f32 %v933, %v961
    %v1010 = vmul.f32 %v934, %v962
    %v1011 = vmul.f32 %v935, %v963
    %v1012 = vmul.f32 %v936, %v964
    %v1013 = vmul.f32 %v937, %v965
    %v1014 = vmul.f32 %v938, %v966
    %v1015 = vmul.f32 %v939, %v967
    %v1016 = vpack.c.bf16 %v992, %v992
    %v1017 = vpack.c.bf16 %v993, %v993
    %v1018 = vpack.c.bf16 %v994, %v994
    %v1019 = vpack.c.bf16 %v995, %v995
    %v1020 = vpack.c.bf16 %v996, %v996
    %v1021 = vpack.c.bf16 %v997, %v997
    %v1022 = vpack.c.bf16 %v998, %v998
    %v1023 = vpack.c.bf16 %v999, %v999
    %v1024 = vpack.c.bf16 %v1000, %v1000
    %v1025 = vpack.c.bf16 %v1001, %v1001
    %v1026 = vpack.c.bf16 %v1002, %v1002
    %v1027 = vpack.c.bf16 %v1003, %v1003
    %v1028 = vpack.c.bf16 %v1004, %v1004
    %v1029 = vpack.c.bf16 %v1005, %v1005
    %v1030 = vpack.c.bf16 %v1006, %v1006
    %v1031 = vpack.c.bf16 %v1007, %v1007
    %v1032 = vpack.c.bf16 %v1008, %v1008
    %v1033 = vpack.c.bf16 %v1009, %v1009
    %v1034 = vpack.c.bf16 %v1010, %v1010
    %v1035 = vpack.c.bf16 %v1011, %v1011
    %v1036 = vpack.c.bf16 %v1012, %v1012
    %v1037 = vpack.c.bf16 %v1013, %v1013
    %v1038 = vpack.c.bf16 %v1014, %v1014
    %v1039 = vpack.c.bf16 %v1015, %v1015
    %v1040 = vld [vmem:[%s4] sm:$0xf]
    %v1041 = vld [vmem:[%s4 + $0x4] sm:$0xf]
    %v1042 = vld [vmem:[%s4 + $0x8] sm:$0xf]
    %v1043 = vld [vmem:[%s4 + $0xc] sm:$0xf]
    %v1044 = vld [vmem:[%s4 + $0x10] sm:$0xf]
    %v1045 = vld [vmem:[%s4 + $0x14] sm:$0xf]
    %v1046 = vld [vmem:[%s4 + $0x18] sm:$0xf]
    %v1047 = vld [vmem:[%s4 + $0x1c] sm:$0xf]
    %v1048 = vld [vmem:[%s4 + $0x20] sm:$0xf]
    %v1049 = vld [vmem:[%s4 + $0x24] sm:$0xf]
    %v1050 = vld [vmem:[%s4 + $0x28] sm:$0xf]
    %v1051 = vld [vmem:[%s4 + $0x2c] sm:$0xf]
    %v1052 = vld [vmem:[%s4 + $0x30] sm:$0xf]
    %v1053 = vld [vmem:[%s4 + $0x34] sm:$0xf]
    %v1054 = vld [vmem:[%s4 + $0x38] sm:$0xf]
    %v1055 = vld [vmem:[%s4 + $0x3c] sm:$0xf]
    %v1056 = vld [vmem:[%s4 + $0x40] sm:$0xf]
    %v1057 = vld [vmem:[%s4 + $0x44] sm:$0xf]
    %v1058 = vld [vmem:[%s4 + $0x48] sm:$0xf]
    %v1059 = vld [vmem:[%s4 + $0x4c] sm:$0xf]
    %v1060 = vld [vmem:[%s4 + $0x50] sm:$0xf]
    %v1061 = vld [vmem:[%s4 + $0x54] sm:$0xf]
    %v1062 = vld [vmem:[%s4 + $0x58] sm:$0xf]
    %v1063 = vld [vmem:[%s4 + $0x5c] sm:$0xf]
    %v1064 = vld [vmem:[%s4 + $0x60] sm:$0xf]
    %v1065 = vld [vmem:[%s4 + $0x64] sm:$0xf]
    %v1066 = vld [vmem:[%s4 + $0x68] sm:$0xf]
    %v1067 = vld [vmem:[%s4 + $0x6c] sm:$0xf]
    %v1068 = vld [vmem:[%s4 + $0x70] sm:$0xf]
    %v1069 = vld [vmem:[%s4 + $0x74] sm:$0xf]
    %v1070 = vld [vmem:[%s4 + $0x78] sm:$0xf]
    %v1071 = vld [vmem:[%s4 + $0x7c] sm:$0xf]
    %v1072 = vld [vmem:[%s4 + $0x80] sm:$0xf]
    %v1073 = vld [vmem:[%s4 + $0x84] sm:$0xf]
    %v1074 = vld [vmem:[%s4 + $0x88] sm:$0xf]
    %v1075 = vld [vmem:[%s4 + $0x8c] sm:$0xf]
    %v1076 = vld [vmem:[%s4 + $0x90] sm:$0xf]
    %v1077 = vld [vmem:[%s4 + $0x94] sm:$0xf]
    %v1078 = vld [vmem:[%s4 + $0x98] sm:$0xf]
    %v1079 = vld [vmem:[%s4 + $0x9c] sm:$0xf]
    %v1080 = vld [vmem:[%s4 + $0xa0] sm:$0xf]
    %v1081 = vld [vmem:[%s4 + $0xa4] sm:$0xf]
    %v1082 = vld [vmem:[%s4 + $0xa8] sm:$0xf]
    %v1083 = vld [vmem:[%s4 + $0xac] sm:$0xf]
    %v1084 = vld [vmem:[%s4 + $0xb0] sm:$0xf]
    %v1085 = vld [vmem:[%s4 + $0xb4] sm:$0xf]
    %v1086 = vld [vmem:[%s4 + $0xb8] sm:$0xf]
    %v1087 = vld [vmem:[%s4 + $0xbc] sm:$0xf]
    %s1088 = scalar_lea.vmem [#allocation7], 48
    %v1089 = vld [vmem:[%s1088] sm:$0xff]
    %v1114 = vunpack.c.l.b16 %v1016
    %v1115 = vunpack.c.l.b16 %v1017
    %v1116 = vunpack.c.l.b16 %v1018
    %v1117 = vunpack.c.l.b16 %v1019
    %v1118 = vunpack.c.l.b16 %v1020
    %v1119 = vunpack.c.l.b16 %v1021
    %v1120 = vunpack.c.l.b16 %v1022
    %v1121 = vunpack.c.l.b16 %v1023
    %v1122 = vunpack.c.l.b16 %v1024
    %v1123 = vunpack.c.l.b16 %v1025
    %v1124 = vunpack.c.l.b16 %v1026
    %v1125 = vunpack.c.l.b16 %v1027
    %v1126 = vunpack.c.l.b16 %v1028
    %v1127 = vunpack.c.l.b16 %v1029
    %v1128 = vunpack.c.l.b16 %v1030
    %v1129 = vunpack.c.l.b16 %v1031
    %v1130 = vunpack.c.l.b16 %v1032
    %v1131 = vunpack.c.l.b16 %v1033
    %v1132 = vunpack.c.l.b16 %v1034
    %v1133 = vunpack.c.l.b16 %v1035
    %v1134 = vunpack.c.l.b16 %v1036
    %v1135 = vunpack.c.l.b16 %v1037
    %v1136 = vunpack.c.l.b16 %v1038
    %v1137 = vunpack.c.l.b16 %v1039
    %v1138 = vrot.slane %v1117, 7
    %vm1139 = vcmask 1041409
    %v1140 = vsel %vm1139, %v1138, %v1114
    %v1141 = vrot.slane %v1120, 6
    %vm1142 = vcmask 1042434
    %v1143 = vsel %vm1142, %v1141, %v1140
    %v1144 = vrot.slane %v1123, 5
    %vm1145 = vcmask 1043459
    %v1146 = vsel %vm1145, %v1144, %v1143
    %v1147 = vrot.slane %v1126, 4
    %vm1148 = vcmask 1044484
    %v1149 = vsel %vm1148, %v1147, %v1146
    %v1150 = vrot.slane %v1129, 3
    %vm1151 = vcmask 1045509
    %v1152 = vsel %vm1151, %v1150, %v1149
    %v1153 = vrot.slane %v1132, 2
    %vm1154 = vcmask 1046534
    %v1155 = vsel %vm1154, %v1153, %v1152
    %v1156 = vrot.slane %v1135, 1
    %vm1157 = vcmask 1047559
    %v1158 = vsel %vm1157, %v1156, %v1155
    %v1159 = vrot.slane %v1118, 7
    %v1160 = vsel %vm1139, %v1159, %v1115
    %v1161 = vrot.slane %v1121, 6
    %v1162 = vsel %vm1142, %v1161, %v1160
    %v1163 = vrot.slane %v1124, 5
    %v1164 = vsel %vm1145, %v1163, %v1162
    %v1165 = vrot.slane %v1127, 4
    %v1166 = vsel %vm1148, %v1165, %v1164
    %v1167 = vrot.slane %v1130, 3
    %v1168 = vsel %vm1151, %v1167, %v1166
    %v1169 = vrot.slane %v1133, 2
    %v1170 = vsel %vm1154, %v1169, %v1168
    %v1171 = vrot.slane %v1136, 1
    %v1172 = vsel %vm1157, %v1171, %v1170
    %v1173 = vrot.slane %v1119, 7
    %v1174 = vsel %vm1139, %v1173, %v1116
    %v1175 = vrot.slane %v1122, 6
    %v1176 = vsel %vm1142, %v1175, %v1174
    %v1177 = vrot.slane %v1125, 5
    %v1178 = vsel %vm1145, %v1177, %v1176
    %v1179 = vrot.slane %v1128, 4
    %v1180 = vsel %vm1148, %v1179, %v1178
    %v1181 = vrot.slane %v1131, 3
    %v1182 = vsel %vm1151, %v1181, %v1180
    %v1183 = vrot.slane %v1134, 2
    %v1184 = vsel %vm1154, %v1183, %v1182
    %v1185 = vrot.slane %v1137, 1
    %v1186 = vsel %vm1157, %v1185, %v1184
    %v1187 = vpack.c.b16 %v1158, %v1158
    %v1188 = vpack.c.b16 %v1172, %v1172
    %v1189 = vpack.c.b16 %v1186, %v1186
    %v1241 = vunpack.c.l.b16 %v1040
    %v1242 = vunpack.c.l.b16 %v1041
    %v1243 = vunpack.c.l.b16 %v1042
    %v1244 = vunpack.c.l.b16 %v1043
    %v1245 = vunpack.c.l.b16 %v1044
    %v1246 = vunpack.c.l.b16 %v1045
    %v1247 = vunpack.c.l.b16 %v1046
    %v1248 = vunpack.c.l.b16 %v1047
    %v1249 = vunpack.c.l.b16 %v1048
    %v1250 = vunpack.c.l.b16 %v1049
    %v1251 = vunpack.c.l.b16 %v1050
    %v1252 = vunpack.c.l.b16 %v1051
    %v1253 = vunpack.c.l.b16 %v1052
    %v1254 = vunpack.c.l.b16 %v1053
    %v1255 = vunpack.c.l.b16 %v1054
    %v1256 = vunpack.c.l.b16 %v1055
    %v1257 = vunpack.c.l.b16 %v1056
    %v1258 = vunpack.c.l.b16 %v1057
    %v1259 = vunpack.c.l.b16 %v1058
    %v1260 = vunpack.c.l.b16 %v1059
    %v1261 = vunpack.c.l.b16 %v1060
    %v1262 = vunpack.c.l.b16 %v1061
    %v1263 = vunpack.c.l.b16 %v1062
    %v1264 = vunpack.c.l.b16 %v1063
    %v1265 = vunpack.c.l.b16 %v1064
    %v1266 = vunpack.c.l.b16 %v1065
    %v1267 = vunpack.c.l.b16 %v1066
    %v1268 = vunpack.c.l.b16 %v1067
    %v1269 = vunpack.c.l.b16 %v1068
    %v1270 = vunpack.c.l.b16 %v1069
    %v1271 = vunpack.c.l.b16 %v1070
    %v1272 = vunpack.c.l.b16 %v1071
    %v1273 = vunpack.c.l.b16 %v1072
    %v1274 = vunpack.c.l.b16 %v1073
    %v1275 = vunpack.c.l.b16 %v1074
    %v1276 = vunpack.c.l.b16 %v1075
    %v1277 = vunpack.c.l.b16 %v1076
    %v1278 = vunpack.c.l.b16 %v1077
    %v1279 = vunpack.c.l.b16 %v1078
    %v1280 = vunpack.c.l.b16 %v1079
    %v1281 = vunpack.c.l.b16 %v1080
    %v1282 = vunpack.c.l.b16 %v1081
    %v1283 = vunpack.c.l.b16 %v1082
    %v1284 = vunpack.c.l.b16 %v1083
    %v1285 = vunpack.c.l.b16 %v1084
    %v1286 = vunpack.c.l.b16 %v1085
    %v1287 = vunpack.c.l.b16 %v1086
    %v1288 = vunpack.c.l.b16 %v1087
    %v1289 = vpack.c.b16 %v1242, %v1241
    %v1290 = vpack.c.b16 %v1244, %v1243
    %v1291 = vpack.c.b16 %v1246, %v1245
    %v1292 = vpack.c.b16 %v1248, %v1247
    %v1293 = vpack.c.b16 %v1250, %v1249
    %v1294 = vpack.c.b16 %v1252, %v1251
    %v1295 = vpack.c.b16 %v1254, %v1253
    %v1296 = vpack.c.b16 %v1256, %v1255
    %v1297 = vpack.c.b16 %v1258, %v1257
    %v1298 = vpack.c.b16 %v1260, %v1259
    %v1299 = vpack.c.b16 %v1262, %v1261
    %v1300 = vpack.c.b16 %v1264, %v1263
    %v1301 = vpack.c.b16 %v1266, %v1265
    %v1302 = vpack.c.b16 %v1268, %v1267
    %v1303 = vpack.c.b16 %v1270, %v1269
    %v1304 = vpack.c.b16 %v1272, %v1271
    %v1305 = vpack.c.b16 %v1274, %v1273
    %v1306 = vpack.c.b16 %v1276, %v1275
    %v1307 = vpack.c.b16 %v1278, %v1277
    %v1308 = vpack.c.b16 %v1280, %v1279
    %v1309 = vpack.c.b16 %v1282, %v1281
    %v1310 = vpack.c.b16 %v1284, %v1283
    %v1311 = vpack.c.b16 %v1286, %v1285
    %v1312 = vpack.c.b16 %v1288, %v1287
    %1337 = vmatprep.subr.bf16.mxu0 0
    %1338 = vmatpush1.bf16.msra.mxu0 %v1289
    %1339 = vmatprep.subr.bf16.mxu0 0
    %1340 = vmatpush1.bf16.msra.mxu0 %v1290
    %1341 = vmatprep.subr.bf16.mxu0 0
    %1342 = vmatpush1.bf16.msra.mxu0 %v1291
    %1343 = vmatprep.subr.bf16.mxu0 0
    %1344 = vmatpush1.bf16.msra.mxu0 %v1292
    %1345 = vmatprep.subr.bf16.mxu0 0
    %1346 = vmatpush1.bf16.msra.mxu0 %v1293
    %1347 = vmatprep.subr.bf16.mxu0 0
    %1348 = vmatpush1.bf16.msra.mxu0 %v1294
    %1349 = vmatprep.subr.bf16.mxu0 0
    %1350 = vmatpush1.bf16.msra.mxu0 %v1295
    %1351 = vmatprep.subr.bf16.mxu0 0
    %1352 = vmatpush1.bf16.msra.mxu0 %v1296
    %1353 = vmatprep.subr.bf16.mxu0 0
    %1354 = vmatpush1.bf16.msra.mxu0 %v1297
    %1355 = vmatprep.subr.bf16.mxu0 0
    %1356 = vmatpush1.bf16.msra.mxu0 %v1298
    %1357 = vmatprep.subr.bf16.mxu0 0
    %1358 = vmatpush1.bf16.msra.mxu0 %v1299
    %1359 = vmatprep.subr.bf16.mxu0 0
    %1360 = vmatpush1.bf16.msra.mxu0 %v1300
    %1361 = vmatprep.subr.bf16.mxu0 0
    %1362 = vmatpush1.bf16.msra.mxu0 %v1301
    %1363 = vmatprep.subr.bf16.mxu0 0
    %1364 = vmatpush1.bf16.msra.mxu0 %v1302
    %1365 = vmatprep.subr.bf16.mxu0 0
    %1366 = vmatpush1.bf16.msra.mxu0 %v1303
    %1367 = vmatprep.subr.bf16.mxu0 0
    %1368 = vmatpush1.bf16.msra.mxu0 %v1304
    %1369 = vmatprep.mubr.bf16.mxu0 %v1188
    %1370 = vmatmul.mubr.bf16.gmra.mrb[0].mxu0 %v1187
    %v1371 = vpop.f32.mrb[0].mxu0
    %v1372 = vadd.f32 %v1089, %v1371
    %v1373 = vpop.f32.mrb[0].mxu0
    %v1374 = vpop.f32.mrb[0].mxu0
    %v1375 = vpop.f32.mrb[0].mxu0
    %1376 = vdwg.mxu0
    %1377 = vmatprep.subr.bf16.mxu0 0
    %1378 = vmatpush1.bf16.msra.mxu0 %v1305
    %1379 = vmatprep.subr.bf16.mxu0 0
    %1380 = vmatpush1.bf16.msra.mxu0 %v1306
    %1381 = vmatprep.subr.bf16.mxu0 0
    %1382 = vmatpush1.bf16.msra.mxu0 %v1307
    %1383 = vmatprep.subr.bf16.mxu0 0
    %1384 = vmatpush1.bf16.msra.mxu0 %v1308
    %1385 = vmatprep.subr.bf16.mxu0 0
    %1386 = vmatpush1.bf16.msra.mxu0 %v1309
    %1387 = vmatprep.subr.bf16.mxu0 0
    %1388 = vmatpush1.bf16.msra.mxu0 %v1310
    %1389 = vmatprep.subr.bf16.mxu0 0
    %1390 = vmatpush1.bf16.msra.mxu0 %v1311
    %1391 = vmatprep.subr.bf16.mxu0 0
    %1392 = vmatpush1.bf16.msra.mxu0 %v1312
    %1393 = vmatprep.subr.bf16.mxu0 0
    %1394 = vmatpush1.bf16.msra.mxu0 0
    %1395 = vmatprep.subr.bf16.mxu0 0
    %1396 = vmatpush1.bf16.msra.mxu0 0
    %1397 = vmatprep.subr.bf16.mxu0 0
    %1398 = vmatpush1.bf16.msra.mxu0 0
    %1399 = vmatprep.subr.bf16.mxu0 0
    %1400 = vmatpush1.bf16.msra.mxu0 0
    %1401 = vmatprep.subr.bf16.mxu0 0
    %1402 = vmatpush1.bf16.msra.mxu0 0
    %1403 = vmatprep.subr.bf16.mxu0 0
    %1404 = vmatpush1.bf16.msra.mxu0 0
    %1405 = vmatprep.subr.bf16.mxu0 0
    %1406 = vmatpush1.bf16.msra.mxu0 0
    %1407 = vmatprep.subr.bf16.mxu0 0
    %1408 = vmatpush1.bf16.msra.mxu0 0
    %1409 = vmatprep.mubr.bf16.mxu0 0
    %1410 = vmatmul.mubr.bf16.gmra.mrb[0].mxu0 %v1189
    %v1411 = vpop.f32.mrb[0].mxu0
    %v1412 = vadd.f32 %v1372, %v1411
    %v1413 = vpop.f32.mrb[0].mxu0
    %v1414 = vpop.f32.mrb[0].mxu0
    %v1415 = vpop.f32.mrb[0].mxu0
    %1416 = vdwg.mxu0
    %v1417 = vmax.f32 %v1412, 0.0
    %s1418 = scalar_lea.vmem [#allocation7], 72
    %v1419 = vld [vmem:[%s1418] sm:$0xff]
    %v1420 = vmul.f32 %v1417, %v1419
    %v1421 = vpack.c.bf16 %v1420, %v1420
    %v1422 = vld [vmem:[#allocation8] sm:$0xf]
    %v1423 = vld [vmem:[#allocation8 + $0x4] sm:$0xf]
    %v1424 = vld [vmem:[#allocation8 + $0x8] sm:$0xf]
    %v1425 = vld [vmem:[#allocation8 + $0xc] sm:$0xf]
    %v1426 = vld [vmem:[#allocation8 + $0x10] sm:$0xf]
    %v1427 = vld [vmem:[#allocation8 + $0x14] sm:$0xf]
    %v1428 = vld [vmem:[#allocation8 + $0x18] sm:$0xf]
    %v1429 = vld [vmem:[#allocation8 + $0x1c] sm:$0xf]
    %v1430 = vld [vmem:[#allocation8 + $0x20] sm:$0xf]
    %v1431 = vld [vmem:[#allocation8 + $0x24] sm:$0xf]
    %v1432 = vld [vmem:[#allocation8 + $0x28] sm:$0xf]
    %v1433 = vld [vmem:[#allocation8 + $0x2c] sm:$0xf]
    %v1434 = vld [vmem:[#allocation8 + $0x30] sm:$0xf]
    %v1435 = vld [vmem:[#allocation8 + $0x34] sm:$0xf]
    %v1436 = vld [vmem:[#allocation8 + $0x38] sm:$0xf]
    %v1437 = vld [vmem:[#allocation8 + $0x3c] sm:$0xf]
    %s1438 = scalar_lea.vmem [#allocation7], 96
    %v1439 = vld [vmem:[%s1438] sm:$0xff]
    %v1456 = vunpack.c.l.b16 %v1422
    %v1457 = vunpack.c.l.b16 %v1423
    %v1458 = vunpack.c.l.b16 %v1424
    %v1459 = vunpack.c.l.b16 %v1425
    %v1460 = vunpack.c.l.b16 %v1426
    %v1461 = vunpack.c.l.b16 %v1427
    %v1462 = vunpack.c.l.b16 %v1428
    %v1463 = vunpack.c.l.b16 %v1429
    %v1464 = vunpack.c.l.b16 %v1430
    %v1465 = vunpack.c.l.b16 %v1431
    %v1466 = vunpack.c.l.b16 %v1432
    %v1467 = vunpack.c.l.b16 %v1433
    %v1468 = vunpack.c.l.b16 %v1434
    %v1469 = vunpack.c.l.b16 %v1435
    %v1470 = vunpack.c.l.b16 %v1436
    %v1471 = vunpack.c.l.b16 %v1437
    %v1472 = vpack.c.b16 %v1457, %v1456
    %v1473 = vpack.c.b16 %v1459, %v1458
    %v1474 = vpack.c.b16 %v1461, %v1460
    %v1475 = vpack.c.b16 %v1463, %v1462
    %v1476 = vpack.c.b16 %v1465, %v1464
    %v1477 = vpack.c.b16 %v1467, %v1466
    %v1478 = vpack.c.b16 %v1469, %v1468
    %v1479 = vpack.c.b16 %v1471, %v1470
    %1488 = vmatprep.subr.bf16.mxu0 0
    %1489 = vmatpush1.bf16.msra.mxu0 %v1472
    %1490 = vmatprep.subr.bf16.mxu0 0
    %1491 = vmatpush1.bf16.msra.mxu0 %v1473
    %1492 = vmatprep.subr.bf16.mxu0 0
    %1493 = vmatpush1.bf16.msra.mxu0 %v1474
    %1494 = vmatprep.subr.bf16.mxu0 0
    %1495 = vmatpush1.bf16.msra.mxu0 %v1475
    %1496 = vmatprep.subr.bf16.mxu0 0
    %1497 = vmatpush1.bf16.msra.mxu0 %v1476
    %1498 = vmatprep.subr.bf16.mxu0 0
    %1499 = vmatpush1.bf16.msra.mxu0 %v1477
    %1500 = vmatprep.subr.bf16.mxu0 0
    %1501 = vmatpush1.bf16.msra.mxu0 %v1478
    %1502 = vmatprep.subr.bf16.mxu0 0
    %1503 = vmatpush1.bf16.msra.mxu0 %v1479
    %1504 = vmatprep.subr.bf16.mxu0 0
    %1505 = vmatpush1.bf16.msra.mxu0 0
    %1506 = vmatprep.subr.bf16.mxu0 0
    %1507 = vmatpush1.bf16.msra.mxu0 0
    %1508 = vmatprep.subr.bf16.mxu0 0
    %1509 = vmatpush1.bf16.msra.mxu0 0
    %1510 = vmatprep.subr.bf16.mxu0 0
    %1511 = vmatpush1.bf16.msra.mxu0 0
    %1512 = vmatprep.subr.bf16.mxu0 0
    %1513 = vmatpush1.bf16.msra.mxu0 0
    %1514 = vmatprep.subr.bf16.mxu0 0
    %1515 = vmatpush1.bf16.msra.mxu0 0
    %1516 = vmatprep.subr.bf16.mxu0 0
    %1517 = vmatpush1.bf16.msra.mxu0 0
    %1518 = vmatprep.subr.bf16.mxu0 0
    %1519 = vmatpush1.bf16.msra.mxu0 0
    %1520 = vmatprep.mubr.bf16.mxu0 0
    %1521 = vmatmul.mubr.bf16.gmra.mrb[0].mxu0 %v1421
    %v1522 = vpop.f32.mrb[0].mxu0
    %v1523 = vadd.f32 %v1439, %v1522
    %v1524 = vpop.f32.mrb[0].mxu0
    %v1525 = vpop.f32.mrb[0].mxu0
    %v1526 = vpop.f32.mrb[0].mxu0
    %1527 = vdwg.mxu0
    %v1528 = vmax.f32 %v1523, 0.0
    %s1529 = scalar_lea.vmem [#allocation7], 120
    %v1530 = vld [vmem:[%s1529] sm:$0xff]
    %v1531 = vmul.f32 %v1528, %v1530
    %v1532 = vpack.c.bf16 %v1531, %v1531
    %v1533 = vld [vmem:[#allocation10] sm:$0xf]
    %v1534 = vld [vmem:[#allocation10 + $0x4] sm:$0xf]
    %v1535 = vld [vmem:[#allocation10 + $0x8] sm:$0xf]
    %v1536 = vld [vmem:[#allocation10 + $0xc] sm:$0xf]
    %v1537 = vld [vmem:[#allocation10 + $0x10] sm:$0xf]
    %v1538 = vld [vmem:[#allocation10 + $0x14] sm:$0xf]
    %v1539 = vld [vmem:[#allocation10 + $0x18] sm:$0xf]
    %v1540 = vld [vmem:[#allocation10 + $0x1c] sm:$0xf]
    %v1541 = vld [vmem:[#allocation10 + $0x20] sm:$0xf]
    %v1542 = vld [vmem:[#allocation10 + $0x24] sm:$0xf]
    %v1543 = vld [vmem:[#allocation10 + $0x28] sm:$0xf]
    %v1544 = vld [vmem:[#allocation10 + $0x2c] sm:$0xf]
    %v1545 = vld [vmem:[#allocation10 + $0x30] sm:$0xf]
    %v1546 = vld [vmem:[#allocation10 + $0x34] sm:$0xf]
    %v1547 = vld [vmem:[#allocation10 + $0x38] sm:$0xf]
    %v1548 = vld [vmem:[#allocation10 + $0x3c] sm:$0xf]
    %s1549 = scalar_lea.vmem [#allocation7], 144
    %v1550 = vld [vmem:[%s1549] sm:$0xff]
    %v1567 = vunpack.c.l.b16 %v1533
    %v1568 = vunpack.c.l.b16 %v1534
    %v1569 = vunpack.c.l.b16 %v1535
    %v1570 = vunpack.c.l.b16 %v1536
    %v1571 = vunpack.c.l.b16 %v1537
    %v1572 = vunpack.c.l.b16 %v1538
    %v1573 = vunpack.c.l.b16 %v1539
    %v1574 = vunpack.c.l.b16 %v1540
    %v1575 = vunpack.c.l.b16 %v1541
    %v1576 = vunpack.c.l.b16 %v1542
    %v1577 = vunpack.c.l.b16 %v1543
    %v1578 = vunpack.c.l.b16 %v1544
    %v1579 = vunpack.c.l.b16 %v1545
    %v1580 = vunpack.c.l.b16 %v1546
    %v1581 = vunpack.c.l.b16 %v1547
    %v1582 = vunpack.c.l.b16 %v1548
    %v1583 = vpack.c.b16 %v1568, %v1567
    %v1584 = vpack.c.b16 %v1570, %v1569
    %v1585 = vpack.c.b16 %v1572, %v1571
    %v1586 = vpack.c.b16 %v1574, %v1573
    %v1587 = vpack.c.b16 %v1576, %v1575
    %v1588 = vpack.c.b16 %v1578, %v1577
    %v1589 = vpack.c.b16 %v1580, %v1579
    %v1590 = vpack.c.b16 %v1582, %v1581
    %1599 = vmatprep.subr.bf16.mxu0 0
    %1600 = vmatpush1.bf16.msra.mxu0 %v1583
    %1601 = vmatprep.subr.bf16.mxu0 0
    %1602 = vmatpush1.bf16.msra.mxu0 %v1584
    %1603 = vmatprep.subr.bf16.mxu0 0
    %1604 = vmatpush1.bf16.msra.mxu0 %v1585
    %1605 = vmatprep.subr.bf16.mxu0 0
    %1606 = vmatpush1.bf16.msra.mxu0 %v1586
    %1607 = vmatprep.subr.bf16.mxu0 0
    %1608 = vmatpush1.bf16.msra.mxu0 %v1587
    %1609 = vmatprep.subr.bf16.mxu0 0
    %1610 = vmatpush1.bf16.msra.mxu0 %v1588
    %1611 = vmatprep.subr.bf16.mxu0 0
    %1612 = vmatpush1.bf16.msra.mxu0 %v1589
    %1613 = vmatprep.subr.bf16.mxu0 0
    %1614 = vmatpush1.bf16.msra.mxu0 %v1590
    %1615 = vmatprep.subr.bf16.mxu0 0
    %1616 = vmatpush1.bf16.msra.mxu0 0
    %1617 = vmatprep.subr.bf16.mxu0 0
    %1618 = vmatpush1.bf16.msra.mxu0 0
    %1619 = vmatprep.subr.bf16.mxu0 0
    %1620 = vmatpush1.bf16.msra.mxu0 0
    %1621 = vmatprep.subr.bf16.mxu0 0
    %1622 = vmatpush1.bf16.msra.mxu0 0
    %1623 = vmatprep.subr.bf16.mxu0 0
    %1624 = vmatpush1.bf16.msra.mxu0 0
    %1625 = vmatprep.subr.bf16.mxu0 0
    %1626 = vmatpush1.bf16.msra.mxu0 0
    %1627 = vmatprep.subr.bf16.mxu0 0
    %1628 = vmatpush1.bf16.msra.mxu0 0
    %1629 = vmatprep.subr.bf16.mxu0 0
    %1630 = vmatpush1.bf16.msra.mxu0 0
    %1631 = vmatprep.mubr.bf16.mxu0 0
    %1632 = vmatmul.mubr.bf16.gmra.mrb[0].mxu0 %v1532
    %v1633 = vpop.f32.mrb[0].mxu0
    %v1634 = vadd.f32 %v1550, %v1633
    %v1635 = vpop.f32.mrb[0].mxu0
    %v1636 = vpop.f32.mrb[0].mxu0
    %v1637 = vpop.f32.mrb[0].mxu0
    %1638 = vdwg.mxu0
    %v1639 = vmul.f32 %v1531, %v1531
    %1640 = vadd.xlane.f32.xlu0 %v1639
    %v1641 = vpop.xlane.xlu0 %1640
    %v1642 = vmax.f32 %v1641, 1e-24
    %v1643 = vrsqrt.pop %v1642
    %v1644 = vmul.f32 %v1531, %v1643
    %v1645 = vadd.f32 %v1644, %v1634
    %1646 = vst [vmem:[#allocation11] sm:$0xff] %v1645
    // Predicated region
    $region50: #{tpu_custom_call.1} parent=1 // pred_check
      _
    $region51: #{tpu_custom_call.1} parent=1 // pred_check_branch
      %1648 = sbr.rel (0) target = $region53
    $region52: #{tpu_custom_call.1} parent=1 // pred_region
      %s1650 = ssub.s32 128, 128
      %1651 = vsyncadd [#allocation4], %s1650
      %s1653 = sshll.u32 [#allocation11], 4
      %s1654 = int_to_ptr.vmem [resolvable:$true] %s1653
      %1656 = dma.vmem_to_hbm [thread:$0]  %s1654, 128, %s7, [#allocation4]
    $region53: #{tpu_custom_call.1} parent=1 // pred_fallthru
      _
    // Predicated region
    $region54: #{tpu_custom_call.1} parent=1 // pred_check
      _
    $region55: #{tpu_custom_call.1} parent=1 // pred_check_branch
      %1658 = sbr.rel (0) target = $region57
    $region56: #{tpu_custom_call.1} parent=1 // pred_region
      %1659 = dma.done [#allocation4], 128
    $region57: #{tpu_custom_call.1} parent=1 // pred_fallthru
      _
    %1660 = vsyncpa [#allocation3], 1
    %1661 = vsyncpa [#allocation6], 1
    %1662 = vsyncpa [#allocation9], 1
    %1663 = vsyncpa [#allocation4], 1

</llo_original>
